<compile_context>
chip_gen: v6e
topology: v6e:2x2x1
jax: 0.10.0
libtpu: 0.0.40
codegen_flags: <defaults>
</compile_context>

<pallas_src>
import functools

import jax
import jax.numpy as jnp
from jax import lax
from jax.experimental import pallas as pl
from jax.experimental.pallas import tpu as pltpu


def _topk_mlp_kernel(x_ref,        # (Bt, d_in)    bf16
                     y_ref,        # (Bt, d_in)    f32
                     wenc_ref,     # (d_in, d_hid) bf16
                     benc_ref,     # (1, d_hid)    f32  (b_pre already folded in)
                     wdec_ref,     # (d_hid, d_in) bf16
                     bdec_ref,     # (1, d_in)     f32
                     coeff_ref,    # (d_hid, 1)    bf16
                     xpred_ref,    # out (Bt, d_in)  f32
                     acts_ref,     # out (Bt, d_hid) bf16
                     losses_ref,   # out (8, 128)    f32  [0,0]=l2 part, [0,1]=l1 part
                     *, k, d_hidden, act, l1_sqrt):
    # ---- encode: act(x @ W_enc + b_enc'), bf16 MXU operands, f32 accumulation
    pre = jnp.dot(x_ref[...], wenc_ref[...],
                  preferred_element_type=jnp.float32) + benc_ref[...]
    if act == 'relu':
        acts = jnp.maximum(pre, 0.0)
    elif act == 'gelu':
        acts = jax.nn.gelu(pre)
    else:
        raise NotImplementedError(act)

    # ---- per-row top-k threshold, fully unrolled (k static), one XLU reduce
    # per step.  All tied maxima are removed at once; with f32 data exact
    # positive ties are vanishingly rare, and the module's own `>= threshold`
    # mask keeps all tied values anyway.
    if k < d_hidden:
        work = acts
        for _ in range(k - 1):
            cur = jnp.max(work, axis=-1, keepdims=True)          # (Bt, 1)
            work = jnp.where(work == cur, -jnp.inf, work)
        thresh = jnp.max(work, axis=-1, keepdims=True)           # k-th largest
        acts = jnp.where(acts >= thresh, acts, 0.0)              # single select

    acts_bf16 = acts.astype(jnp.bfloat16)

    # ---- decode: acts @ W_dec + b_dec (bf16 MXU operands, f32 accumulation)
    x_pred = jnp.dot(acts_bf16, wdec_ref[...],
                     preferred_element_type=jnp.float32) + bdec_ref[...]

    xpred_ref[...] = x_pred
    acts_ref[...] = acts_bf16          # bf16 writeback (half the HBM traffic)

    # ---- partial losses for this batch tile (finished outside the kernel)
    diff = x_pred - y_ref[...]
    l2_part = jnp.sum(jnp.sum(diff * diff, axis=-1, keepdims=True),
                      axis=0, keepdims=True)                     # (1, 1)

    if act == 'relu' and not l1_sqrt:
        pos = acts_bf16                 # masked relu acts are already >= 0
    else:
        pos = jnp.maximum(acts, 0.0)
        if l1_sqrt:
            pos = jnp.sqrt(pos)
        pos = pos.astype(jnp.bfloat16)
    # L1 lane-reduce on the MXU: (Bt, d_hid) @ (d_hid, 1) -> (Bt, 1)
    l1_rows = jnp.dot(pos, coeff_ref[...], preferred_element_type=jnp.float32)
    l1_part = jnp.sum(l1_rows, axis=0, keepdims=True)            # (1, 1)

    losses_ref[...] = jnp.zeros_like(losses_ref)
    losses_ref[0:1, 0:1] = l2_part
    losses_ref[0:1, 1:2] = l1_part


def _default_vmem_limit_bytes():
    """Per-generation VMEM cap: stay under v7x's 64 MiB, use more on v5e/v6e."""
    try:
        cap = pltpu.get_tpu_info().vmem_capacity_bytes
    except Exception:
        cap = 64 * 1024 * 1024
    return max(32 * 1024 * 1024, min(cap - 6 * 1024 * 1024, 100 * 1024 * 1024))


def topk_mlp_forward(x, y, params, l1_coeff, *, k, act='relu',
                     add_pre_bias=True, l1_sqrt=False, batch_tile=None,
                     vmem_limit_bytes=None):
    B, d_in = x.shape
    d_hidden = params['W_enc'].shape[1]

    if batch_tile is None:
        batch_tile = min(B, 128)
        # prefer >= 2 grid tiles so v7x's second TensorCore gets work
        while B // batch_tile < 2 and batch_tile >= 32 and batch_tile % 2 == 0:
            batch_tile //= 2
    assert B % batch_tile == 0, "batch must be divisible by batch_tile"
    assert batch_tile == B or batch_tile % 16 == 0, \
        "batch_tile must be a multiple of 16 (bf16 sublane tiling) or equal B"
    num_tiles = B // batch_tile

    if vmem_limit_bytes is None:
        vmem_limit_bytes = _default_vmem_limit_bytes()

    # Fold b_pre into b_enc outside the kernel: (x + b_pre) @ W = x @ W + b_pre @ W.
    b_enc_eff = params['b_enc'].reshape(1, d_hidden).astype(jnp.float32)
    if add_pre_bias:
        b_enc_eff = b_enc_eff + jnp.dot(
            params['b_pre'].reshape(1, d_in).astype(jnp.float32),
            params['W_enc'].astype(jnp.float32))

    kernel = functools.partial(
        _topk_mlp_kernel, k=k, d_hidden=d_hidden, act=act, l1_sqrt=l1_sqrt)

    batch_map = lambda i: (i, 0)     # tiles along batch
    const_map = lambda i: (0, 0)     # weights/biases stay VMEM-resident

    out_specs = (
        pl.BlockSpec((batch_tile, d_in), batch_map),        # x_pred (f32)
        pl.BlockSpec((batch_tile, d_hidden), batch_map),    # activations (bf16)
        pl.BlockSpec((8, 128), batch_map),                  # partial losses
    )
    out_shapes = (
        jax.ShapeDtypeStruct((B, d_in), jnp.float32),
        jax.ShapeDtypeStruct((B, d_hidden), jnp.bfloat16),
        jax.ShapeDtypeStruct((num_tiles * 8, 128), jnp.float32),
    )

    flops = 4 * B * d_in * d_hidden + 2 * B * d_hidden   # 2 matmuls + l1 matvec
    bytes_accessed = (B * d_in * 2 + B * d_in * 4              # x (bf16), y (f32)
                      + 2 * d_in * d_hidden * 2                # W_enc, W_dec (bf16)
                      + (d_in * 2 + d_hidden) * 4              # biases (f32)
                      + d_hidden * 2                           # coeff column (bf16)
                      + B * d_in * 4 + B * d_hidden * 2        # x_pred f32, acts bf16
                      + num_tiles * 8 * 128 * 4)               # partial losses
    cost = pl.CostEstimate(
        flops=flops,
        transcendentals=(B * d_hidden if act == 'gelu' else 0),
        bytes_accessed=bytes_accessed)

    call_args = (x.astype(jnp.bfloat16),
                 y.astype(jnp.float32),
                 params['W_enc'].astype(jnp.bfloat16),
                 b_enc_eff,
                 params['W_dec'].astype(jnp.bfloat16),
                 params['b_dec'].reshape(1, d_in).astype(jnp.float32),
                 params['per_neuron_coeff'].reshape(d_hidden, 1).astype(jnp.bfloat16))

    def _run(single_buffer_consts):
        if single_buffer_consts:
            # weights are never re-fetched across grid steps -> no need to
            # double-buffer them (halves their VMEM footprint).
            def const_spec(shape):
                return pl.BlockSpec(shape, const_map, pipeline_mode=pl.Buffered(1))
        else:
            def const_spec(shape):
                return pl.BlockSpec(shape, const_map)
        in_specs = [
            pl.BlockSpec((batch_tile, d_in), batch_map),     # x (bf16)
            pl.BlockSpec((batch_tile, d_in), batch_map),     # y (f32)
            const_spec((d_in, d_hidden)),                    # W_enc (bf16)
            const_spec((1, d_hidden)),                       # b_enc' (f32)
            const_spec((d_hidden, d_in)),                    # W_dec (bf16)
            const_spec((1, d_in)),                           # b_dec (f32)
            const_spec((d_hidden, 1)),                       # coeff column (bf16)
        ]
        return pl.pallas_call(
            kernel,
            out_shape=out_shapes,
            grid_spec=pltpu.PrefetchScalarGridSpec(
                num_scalar_prefetch=0,
                grid=(num_tiles,),
                in_specs=in_specs,
                out_specs=out_specs),
            compiler_params=pltpu.CompilerParams(
                dimension_semantics=("parallel",),
                vmem_limit_bytes=vmem_limit_bytes),
            cost_estimate=cost,
        )(*call_args)

    try:
        x_pred, acts, partial = _run(True)
    except Exception:
        # pipeline_mode=pl.Buffered(1) not supported by this jax version;
        # fall back to default (double-buffered) resident-weight specs.
        x_pred, acts, partial = _run(False)

    # finish the tiny reductions outside the kernel (keeps the batch axis
    # fully parallel inside it).
    l2_loss = jnp.sum(partial[:, 0]) / B
    l1_loss = jnp.asarray(l1_coeff, jnp.float32) * jnp.sum(partial[:, 1])
    loss = l2_loss + l1_loss
    return loss, x_pred, acts, l2_loss, l1_loss


def init_params(key, d_in, d_hidden_mult, per_neuron_coeff=True):
    """Deterministic init mirroring topK_MLP.__init__ shapes/semantics."""
    d_hidden = d_in * d_hidden_mult
    k1, k2, k3, k4, k5 = jax.random.split(key, 5)
    # kaiming_uniform_ (torch default): bound = sqrt(6 / fan_in), fan_in = size(1)
    b_enc_bound = jnp.sqrt(6.0 / d_hidden)
    W_enc = jax.random.uniform(k1, (d_in, d_hidden), jnp.float32,
                               -b_enc_bound, b_enc_bound)
    b_dec_bound = jnp.sqrt(6.0 / d_in)
    W_dec = jax.random.uniform(k2, (d_hidden, d_in), jnp.float32,
                               -b_dec_bound, b_dec_bound)
    W_dec = W_dec / jnp.linalg.norm(W_dec, axis=-1, keepdims=True)
    coeff = (jnp.linspace(2.0, 0.0, d_hidden, dtype=jnp.float32)
             if per_neuron_coeff else jnp.ones((d_hidden,), jnp.float32))
    # module init zeroes the biases; small random values here so the bias
    # paths (incl. the b_pre fold) are actually exercised by the test.
    return {
        'W_enc': W_enc,
        'W_dec': W_dec,
        'b_enc': 0.01 * jax.random.normal(k3, (1, d_hidden), jnp.float32),
        'b_dec': 0.01 * jax.random.normal(k4, (1, d_in), jnp.float32),
        'b_pre': 0.01 * jax.random.normal(k5, (1, d_in), jnp.float32),
        'per_neuron_coeff': coeff.reshape(1, d_hidden),
    }


def reference_forward(x, y, params, l1_coeff, *, k, act='relu',
                      add_pre_bias=True, l1_sqrt=False):
    """Pure-JAX reference matching the PyTorch forward, using the same
    bf16-operand / f32-accumulation matmul path (and b_pre fold) as the kernel."""
    B, d_in = x.shape
    d_hidden = params['W_enc'].shape[1]
    w_enc = params['W_enc'].astype(jnp.bfloat16)
    w_dec = params['W_dec'].astype(jnp.bfloat16)
    b_enc = params['b_enc'].reshape(1, d_hidden).astype(jnp.float32)
    if add_pre_bias:
        b_enc = b_enc + jnp.dot(params['b_pre'].reshape(1, d_in).astype(jnp.float32),
                                params['W_enc'].astype(jnp.float32))
    pre = jnp.dot(x.astype(jnp.bfloat16), w_enc,
                  preferred_element_type=jnp.float32) + b_enc
    acts = jax.nn.relu(pre) if act == 'relu' else jax.nn.gelu(pre)
    if k < d_hidden:
        thr = lax.top_k(acts, k)[0][:, -1:]
        acts = jnp.where(acts >= thr, acts, 0.0)
    x_pred = (jnp.dot(acts.astype(jnp.bfloat16), w_dec,
                      preferred_element_type=jnp.float32)
              + params['b_dec'].reshape(1, d_in))
    l2 = jnp.mean(jnp.sum((x_pred - y) ** 2, axis=-1))
    pos = jax.nn.relu(acts)
    if l1_sqrt:
        pos = jnp.sqrt(pos)
    l1 = l1_coeff * jnp.sum(jnp.sum(pos, axis=0)
                            * params['per_neuron_coeff'].reshape(-1))
    return l2 + l1, x_pred, acts, l2, l1


def _check(B, batch_tile, d_in, mult, k, l1_coeff, key):
    kp, kx, ky = jax.random.split(key, 3)
    params = init_params(kp, d_in, mult, per_neuron_coeff=True)
    x = jax.random.normal(kx, (B, d_in), jnp.float32)
    y = jax.random.normal(ky, (B, d_in), jnp.float32)

    loss, x_pred, acts, l2, l1 = topk_mlp_forward(
        x, y, params, l1_coeff, k=k, act='relu',
        add_pre_bias=True, l1_sqrt=False, batch_tile=batch_tile)
    jax.block_until_ready((loss, x_pred, acts, l2, l1))

    r_loss, r_pred, r_acts, r_l2, r_l1 = reference_forward(
        x, y, params, l1_coeff, k=k, act='relu',
        add_pre_bias=True, l1_sqrt=False)

    # acts are returned in bf16 -> compare with bf16-level tolerance
    assert jnp.allclose(acts.astype(jnp.float32), r_acts, rtol=2e-2, atol=2e-2)
    assert jnp.allclose(x_pred, r_pred, rtol=5e-3, atol=5e-3)
    assert jnp.allclose(loss, r_loss, rtol=5e-3, atol=5e-3)
    assert jnp.allclose(l2, r_l2, rtol=5e-3, atol=5e-3)
    assert jnp.allclose(l1, r_l1, rtol=5e-3, atol=5e-3)


if __name__ == "__main__":
    # cfg: d_in=32, d_hidden_mult=4 -> d_hidden=128, k=16,
    #      act='relu', add_pre_bias=True, per_neuron_coeff=True, l1_sqrt=False
    key = jax.random.PRNGKey(0)
    k1, k2 = jax.random.split(key)

    # single-tile call (grid = 1, block == full array)
    _check(B=8, batch_tile=8, d_in=32, mult=4, k=16, l1_coeff=1e-3, key=k1)
    # default batch_tile picks >= 2 tiles -> exercises the parallel batch grid
    _check(B=64, batch_tile=None, d_in=32, mult=4, k=16, l1_coeff=1e-3, key=k2)

    print("KERNEL_OK")
</pallas_src>

<mosaic_0001>
module attributes {stable_mosaic.version = 11 : i64} {
  func.func @_topk_mlp_kernel(%arg0: i32, %arg1: memref<8x32xbf16, #tpu.memory_space<vmem>>, %arg2: memref<8x32xf32, #tpu.memory_space<vmem>>, %arg3: memref<32x128xbf16, #tpu.memory_space<vmem>>, %arg4: memref<1x128xf32, #tpu.memory_space<vmem>>, %arg5: memref<128x32xbf16, #tpu.memory_space<vmem>>, %arg6: memref<1x32xf32, #tpu.memory_space<vmem>>, %arg7: memref<128x1xbf16, #tpu.memory_space<vmem>>, %arg8: memref<8x32xf32, #tpu.memory_space<vmem>>, %arg9: memref<8x128xbf16, #tpu.memory_space<vmem>>, %arg10: memref<8x128xf32, #tpu.memory_space<vmem>>) attributes {dimension_semantics = [#tpu.dimension_semantics<parallel>], iteration_bounds = array<i64: 1>, scalar_prefetch = 0 : i64, scratch_operands = 0 : i64, tpu.core_type = #tpu.core_type<tc>, window_params = [{transform_indices = @transform_0, window_bounds = array<i64: 8, 32>}, {transform_indices = @transform_1, window_bounds = array<i64: 8, 32>}, {pipeline_mode = #tpu.pipeline_mode<synchronous>, transform_indices = @transform_2, window_bounds = array<i64: 32, 128>}, {pipeline_mode = #tpu.pipeline_mode<synchronous>, transform_indices = @transform_3, window_bounds = array<i64: 1, 128>}, {pipeline_mode = #tpu.pipeline_mode<synchronous>, transform_indices = @transform_4, window_bounds = array<i64: 128, 32>}, {pipeline_mode = #tpu.pipeline_mode<synchronous>, transform_indices = @transform_5, window_bounds = array<i64: 1, 32>}, {pipeline_mode = #tpu.pipeline_mode<synchronous>, transform_indices = @transform_6, window_bounds = array<i64: 128, 1>}, {transform_indices = @transform_7, window_bounds = array<i64: 8, 32>}, {transform_indices = @transform_8, window_bounds = array<i64: 8, 128>}, {transform_indices = @transform_9, window_bounds = array<i64: 8, 128>}]} {
    %c0 = arith.constant 0 : index
    %c0_0 = arith.constant 0 : index
    %0 = vector.load %arg1[%c0, %c0_0] : memref<8x32xbf16, #tpu.memory_space<vmem>>, vector<8x32xbf16>
    %c0_1 = arith.constant 0 : index
    %c0_2 = arith.constant 0 : index
    %1 = vector.load %arg3[%c0_1, %c0_2] : memref<32x128xbf16, #tpu.memory_space<vmem>>, vector<32x128xbf16>
    %cst = arith.constant dense<0.000000e+00> : vector<8x128xf32>
    %2 = tpu.matmul %0, %1, %cst {dimension_numbers = #tpu.dot_dimension_numbers<[1], [0], [0], [1], [0, 0, 1, 1], [], []>} : vector<8x32xbf16>, vector<32x128xbf16>, vector<8x128xf32> -> vector<8x128xf32>
    %c0_3 = arith.constant 0 : index
    %c0_4 = arith.constant 0 : index
    %3 = vector.load %arg4[%c0_3, %c0_4] : memref<1x128xf32, #tpu.memory_space<vmem>>, vector<1x128xf32>
    %4 = vector.broadcast %3 : vector<1x128xf32> to vector<8x128xf32>
    %5 = arith.addf %2, %4 : vector<8x128xf32>
    %cst_5 = arith.constant 0.000000e+00 : f32
    %6 = vector.broadcast %cst_5 : f32 to vector<8x128xf32>
    %7 = arith.maximumf %5, %6 : vector<8x128xf32>
    %cst_6 = arith.constant dense<0xFF800000> : vector<8xf32>
    %8 = vector.multi_reduction <maximumf>, %7, %cst_6 [1] : vector<8x128xf32> to vector<8xf32>
    %9 = vector.shape_cast %8 : vector<8xf32> to vector<8x1xf32>
    %10 = vector.broadcast %9 : vector<8x1xf32> to vector<8x128xf32>
    %11 = arith.cmpf oeq, %7, %10 : vector<8x128xf32>
    %cst_7 = arith.constant 0xFF800000 : f32
    %12 = vector.broadcast %cst_7 : f32 to vector<8x128xf32>
    %13 = arith.select %11, %12, %7 : vector<8x128xi1>, vector<8x128xf32>
    %cst_8 = arith.constant dense<0xFF800000> : vector<8xf32>
    %14 = vector.multi_reduction <maximumf>, %13, %cst_8 [1] : vector<8x128xf32> to vector<8xf32>
    %15 = vector.shape_cast %14 : vector<8xf32> to vector<8x1xf32>
    %16 = vector.broadcast %15 : vector<8x1xf32> to vector<8x128xf32>
    %17 = arith.cmpf oeq, %13, %16 : vector<8x128xf32>
    %cst_9 = arith.constant 0xFF800000 : f32
    %18 = vector.broadcast %cst_9 : f32 to vector<8x128xf32>
    %19 = arith.select %17, %18, %13 : vector<8x128xi1>, vector<8x128xf32>
    %cst_10 = arith.constant dense<0xFF800000> : vector<8xf32>
    %20 = vector.multi_reduction <maximumf>, %19, %cst_10 [1] : vector<8x128xf32> to vector<8xf32>
    %21 = vector.shape_cast %20 : vector<8xf32> to vector<8x1xf32>
    %22 = vector.broadcast %21 : vector<8x1xf32> to vector<8x128xf32>
    %23 = arith.cmpf oeq, %19, %22 : vector<8x128xf32>
    %cst_11 = arith.constant 0xFF800000 : f32
    %24 = vector.broadcast %cst_11 : f32 to vector<8x128xf32>
    %25 = arith.select %23, %24, %19 : vector<8x128xi1>, vector<8x128xf32>
    %cst_12 = arith.constant dense<0xFF800000> : vector<8xf32>
    %26 = vector.multi_reduction <maximumf>, %25, %cst_12 [1] : vector<8x128xf32> to vector<8xf32>
    %27 = vector.shape_cast %26 : vector<8xf32> to vector<8x1xf32>
    %28 = vector.broadcast %27 : vector<8x1xf32> to vector<8x128xf32>
    %29 = arith.cmpf oeq, %25, %28 : vector<8x128xf32>
    %cst_13 = arith.constant 0xFF800000 : f32
    %30 = vector.broadcast %cst_13 : f32 to vector<8x128xf32>
    %31 = arith.select %29, %30, %25 : vector<8x128xi1>, vector<8x128xf32>
    %cst_14 = arith.constant dense<0xFF800000> : vector<8xf32>
    %32 = vector.multi_reduction <maximumf>, %31, %cst_14 [1] : vector<8x128xf32> to vector<8xf32>
    %33 = vector.shape_cast %32 : vector<8xf32> to vector<8x1xf32>
    %34 = vector.broadcast %33 : vector<8x1xf32> to vector<8x128xf32>
    %35 = arith.cmpf oeq, %31, %34 : vector<8x128xf32>
    %cst_15 = arith.constant 0xFF800000 : f32
    %36 = vector.broadcast %cst_15 : f32 to vector<8x128xf32>
    %37 = arith.select %35, %36, %31 : vector<8x128xi1>, vector<8x128xf32>
    %cst_16 = arith.constant dense<0xFF800000> : vector<8xf32>
    %38 = vector.multi_reduction <maximumf>, %37, %cst_16 [1] : vector<8x128xf32> to vector<8xf32>
    %39 = vector.shape_cast %38 : vector<8xf32> to vector<8x1xf32>
    %40 = vector.broadcast %39 : vector<8x1xf32> to vector<8x128xf32>
    %41 = arith.cmpf oeq, %37, %40 : vector<8x128xf32>
    %cst_17 = arith.constant 0xFF800000 : f32
    %42 = vector.broadcast %cst_17 : f32 to vector<8x128xf32>
    %43 = arith.select %41, %42, %37 : vector<8x128xi1>, vector<8x128xf32>
    %cst_18 = arith.constant dense<0xFF800000> : vector<8xf32>
    %44 = vector.multi_reduction <maximumf>, %43, %cst_18 [1] : vector<8x128xf32> to vector<8xf32>
    %45 = vector.shape_cast %44 : vector<8xf32> to vector<8x1xf32>
    %46 = vector.broadcast %45 : vector<8x1xf32> to vector<8x128xf32>
    %47 = arith.cmpf oeq, %43, %46 : vector<8x128xf32>
    %cst_19 = arith.constant 0xFF800000 : f32
    %48 = vector.broadcast %cst_19 : f32 to vector<8x128xf32>
    %49 = arith.select %47, %48, %43 : vector<8x128xi1>, vector<8x128xf32>
    %cst_20 = arith.constant dense<0xFF800000> : vector<8xf32>
    %50 = vector.multi_reduction <maximumf>, %49, %cst_20 [1] : vector<8x128xf32> to vector<8xf32>
    %51 = vector.shape_cast %50 : vector<8xf32> to vector<8x1xf32>
    %52 = vector.broadcast %51 : vector<8x1xf32> to vector<8x128xf32>
    %53 = arith.cmpf oeq, %49, %52 : vector<8x128xf32>
    %cst_21 = arith.constant 0xFF800000 : f32
    %54 = vector.broadcast %cst_21 : f32 to vector<8x128xf32>
    %55 = arith.select %53, %54, %49 : vector<8x128xi1>, vector<8x128xf32>
    %cst_22 = arith.constant dense<0xFF800000> : vector<8xf32>
    %56 = vector.multi_reduction <maximumf>, %55, %cst_22 [1] : vector<8x128xf32> to vector<8xf32>
    %57 = vector.shape_cast %56 : vector<8xf32> to vector<8x1xf32>
    %58 = vector.broadcast %57 : vector<8x1xf32> to vector<8x128xf32>
    %59 = arith.cmpf oeq, %55, %58 : vector<8x128xf32>
    %cst_23 = arith.constant 0xFF800000 : f32
    %60 = vector.broadcast %cst_23 : f32 to vector<8x128xf32>
    %61 = arith.select %59, %60, %55 : vector<8x128xi1>, vector<8x128xf32>
    %cst_24 = arith.constant dense<0xFF800000> : vector<8xf32>
    %62 = vector.multi_reduction <maximumf>, %61, %cst_24 [1] : vector<8x128xf32> to vector<8xf32>
    %63 = vector.shape_cast %62 : vector<8xf32> to vector<8x1xf32>
    %64 = vector.broadcast %63 : vector<8x1xf32> to vector<8x128xf32>
    %65 = arith.cmpf oeq, %61, %64 : vector<8x128xf32>
    %cst_25 = arith.constant 0xFF800000 : f32
    %66 = vector.broadcast %cst_25 : f32 to vector<8x128xf32>
    %67 = arith.select %65, %66, %61 : vector<8x128xi1>, vector<8x128xf32>
    %cst_26 = arith.constant dense<0xFF800000> : vector<8xf32>
    %68 = vector.multi_reduction <maximumf>, %67, %cst_26 [1] : vector<8x128xf32> to vector<8xf32>
    %69 = vector.shape_cast %68 : vector<8xf32> to vector<8x1xf32>
    %70 = vector.broadcast %69 : vector<8x1xf32> to vector<8x128xf32>
    %71 = arith.cmpf oeq, %67, %70 : vector<8x128xf32>
    %cst_27 = arith.constant 0xFF800000 : f32
    %72 = vector.broadcast %cst_27 : f32 to vector<8x128xf32>
    %73 = arith.select %71, %72, %67 : vector<8x128xi1>, vector<8x128xf32>
    %cst_28 = arith.constant dense<0xFF800000> : vector<8xf32>
    %74 = vector.multi_reduction <maximumf>, %73, %cst_28 [1] : vector<8x128xf32> to vector<8xf32>
    %75 = vector.shape_cast %74 : vector<8xf32> to vector<8x1xf32>
    %76 = vector.broadcast %75 : vector<8x1xf32> to vector<8x128xf32>
    %77 = arith.cmpf oeq, %73, %76 : vector<8x128xf32>
    %cst_29 = arith.constant 0xFF800000 : f32
    %78 = vector.broadcast %cst_29 : f32 to vector<8x128xf32>
    %79 = arith.select %77, %78, %73 : vector<8x128xi1>, vector<8x128xf32>
    %cst_30 = arith.constant dense<0xFF800000> : vector<8xf32>
    %80 = vector.multi_reduction <maximumf>, %79, %cst_30 [1] : vector<8x128xf32> to vector<8xf32>
    %81 = vector.shape_cast %80 : vector<8xf32> to vector<8x1xf32>
    %82 = vector.broadcast %81 : vector<8x1xf32> to vector<8x128xf32>
    %83 = arith.cmpf oeq, %79, %82 : vector<8x128xf32>
    %cst_31 = arith.constant 0xFF800000 : f32
    %84 = vector.broadcast %cst_31 : f32 to vector<8x128xf32>
    %85 = arith.select %83, %84, %79 : vector<8x128xi1>, vector<8x128xf32>
    %cst_32 = arith.constant dense<0xFF800000> : vector<8xf32>
    %86 = vector.multi_reduction <maximumf>, %85, %cst_32 [1] : vector<8x128xf32> to vector<8xf32>
    %87 = vector.shape_cast %86 : vector<8xf32> to vector<8x1xf32>
    %88 = vector.broadcast %87 : vector<8x1xf32> to vector<8x128xf32>
    %89 = arith.cmpf oeq, %85, %88 : vector<8x128xf32>
    %cst_33 = arith.constant 0xFF800000 : f32
    %90 = vector.broadcast %cst_33 : f32 to vector<8x128xf32>
    %91 = arith.select %89, %90, %85 : vector<8x128xi1>, vector<8x128xf32>
    %cst_34 = arith.constant dense<0xFF800000> : vector<8xf32>
    %92 = vector.multi_reduction <maximumf>, %91, %cst_34 [1] : vector<8x128xf32> to vector<8xf32>
    %93 = vector.shape_cast %92 : vector<8xf32> to vector<8x1xf32>
    %94 = vector.broadcast %93 : vector<8x1xf32> to vector<8x128xf32>
    %95 = arith.cmpf oeq, %91, %94 : vector<8x128xf32>
    %cst_35 = arith.constant 0xFF800000 : f32
    %96 = vector.broadcast %cst_35 : f32 to vector<8x128xf32>
    %97 = arith.select %95, %96, %91 : vector<8x128xi1>, vector<8x128xf32>
    %cst_36 = arith.constant dense<0xFF800000> : vector<8xf32>
    %98 = vector.multi_reduction <maximumf>, %97, %cst_36 [1] : vector<8x128xf32> to vector<8xf32>
    %99 = vector.shape_cast %98 : vector<8xf32> to vector<8x1xf32>
    %100 = vector.broadcast %99 : vector<8x1xf32> to vector<8x128xf32>
    %101 = arith.cmpf oge, %7, %100 : vector<8x128xf32>
    %cst_37 = arith.constant 0.000000e+00 : f32
    %102 = vector.broadcast %cst_37 : f32 to vector<8x128xf32>
    %103 = arith.select %101, %7, %102 : vector<8x128xi1>, vector<8x128xf32>
    %104 = arith.truncf %103 : vector<8x128xf32> to vector<8x128xbf16>
    %c0_38 = arith.constant 0 : index
    %c0_39 = arith.constant 0 : index
    %105 = vector.load %arg5[%c0_38, %c0_39] : memref<128x32xbf16, #tpu.memory_space<vmem>>, vector<128x32xbf16>
    %cst_40 = arith.constant dense<0.000000e+00> : vector<8x32xf32>
    %106 = tpu.matmul %104, %105, %cst_40 {dimension_numbers = #tpu.dot_dimension_numbers<[1], [0], [0], [1], [0, 0, 1, 1], [], []>} : vector<8x128xbf16>, vector<128x32xbf16>, vector<8x32xf32> -> vector<8x32xf32>
    %c0_41 = arith.constant 0 : index
    %c0_42 = arith.constant 0 : index
    %107 = vector.load %arg6[%c0_41, %c0_42] : memref<1x32xf32, #tpu.memory_space<vmem>>, vector<1x32xf32>
    %108 = vector.broadcast %107 : vector<1x32xf32> to vector<8x32xf32>
    %109 = arith.addf %106, %108 : vector<8x32xf32>
    %c0_43 = arith.constant 0 : index
    %c0_44 = arith.constant 0 : index
    %110 = vector.load %arg8[%c0_43, %c0_44] : memref<8x32xf32, #tpu.memory_space<vmem>>, vector<8x32xf32>
    tpu.vector_store %arg8[%c0_43, %c0_44], %109 {strides = array<i32>} : memref<8x32xf32, #tpu.memory_space<vmem>>, vector<8x32xf32>,
    %c0_45 = arith.constant 0 : index
    %c0_46 = arith.constant 0 : index
    %111 = vector.load %arg9[%c0_45, %c0_46] : memref<8x128xbf16, #tpu.memory_space<vmem>>, vector<8x128xbf16>
    tpu.vector_store %arg9[%c0_45, %c0_46], %104 {strides = array<i32>} : memref<8x128xbf16, #tpu.memory_space<vmem>>, vector<8x128xbf16>,
    %c0_47 = arith.constant 0 : index
    %c0_48 = arith.constant 0 : index
    %112 = vector.load %arg2[%c0_47, %c0_48] : memref<8x32xf32, #tpu.memory_space<vmem>>, vector<8x32xf32>
    %113 = arith.subf %109, %112 : vector<8x32xf32>
    %114 = arith.mulf %113, %113 : vector<8x32xf32>
    %cst_49 = arith.constant dense<0.000000e+00> : vector<8xf32>
    %115 = vector.multi_reduction <add>, %114, %cst_49 [1] : vector<8x32xf32> to vector<8xf32>
    %116 = vector.shape_cast %115 : vector<8xf32> to vector<8x1xf32>
    %cst_50 = arith.constant dense<0.000000e+00> : vector<1xf32>
    %117 = vector.multi_reduction <add>, %116, %cst_50 [0] : vector<8x1xf32> to vector<1xf32>
    %118 = vector.shape_cast %117 : vector<1xf32> to vector<1x1xf32>
    %c0_51 = arith.constant 0 : index
    %c0_52 = arith.constant 0 : index
    %119 = vector.load %arg7[%c0_51, %c0_52] : memref<128x1xbf16, #tpu.memory_space<vmem>>, vector<128x1xbf16>
    %cst_53 = arith.constant dense<0.000000e+00> : vector<8x1xf32>
    %120 = tpu.matmul %104, %119, %cst_53 {dimension_numbers = #tpu.dot_dimension_numbers<[1], [0], [0], [1], [0, 0, 1, 1], [], []>} : vector<8x128xbf16>, vector<128x1xbf16>, vector<8x1xf32> -> vector<8x1xf32>
    %cst_54 = arith.constant dense<0.000000e+00> : vector<1xf32>
    %121 = vector.multi_reduction <add>, %120, %cst_54 [0] : vector<8x1xf32> to vector<1xf32>
    %122 = vector.shape_cast %121 : vector<1xf32> to vector<1x1xf32>
    %cst_55 = arith.constant 0.000000e+00 : f32
    %123 = vector.broadcast %cst_55 : f32 to vector<8x128xf32>
    %c0_56 = arith.constant 0 : index
    %c0_57 = arith.constant 0 : index
    %124 = vector.load %arg10[%c0_56, %c0_57] : memref<8x128xf32, #tpu.memory_space<vmem>>, vector<8x128xf32>
    tpu.vector_store %arg10[%c0_56, %c0_57], %123 {strides = array<i32>} : memref<8x128xf32, #tpu.memory_space<vmem>>, vector<8x128xf32>,
    %c0_58 = arith.constant 0 : index
    %c0_59 = arith.constant 0 : index
    %125 = vector.load %arg10[%c0_58, %c0_59] : memref<8x128xf32, #tpu.memory_space<vmem>>, vector<1x1xf32>
    tpu.vector_store %arg10[%c0_58, %c0_59], %118 {strides = array<i32>} : memref<8x128xf32, #tpu.memory_space<vmem>>, vector<1x1xf32>,
    %c0_60 = arith.constant 0 : index
    %c1 = arith.constant 1 : index
    %126 = vector.load %arg10[%c0_60, %c1] : memref<8x128xf32, #tpu.memory_space<vmem>>, vector<1x1xf32>
    tpu.vector_store %arg10[%c0_60, %c1], %122 {strides = array<i32>} : memref<8x128xf32, #tpu.memory_space<vmem>>, vector<1x1xf32>,
    return
  }
  func.func @transform_0(%arg0: i32) -> (i32, i32) {
    %c0_i32 = arith.constant 0 : i32
    %c0_i32_0 = arith.constant 0 : i32
    return %arg0, %c0_i32 : i32, i32
  }
  func.func @transform_1(%arg0: i32) -> (i32, i32) {
    %c0_i32 = arith.constant 0 : i32
    %c0_i32_0 = arith.constant 0 : i32
    return %arg0, %c0_i32 : i32, i32
  }
  func.func @transform_2(%arg0: i32) -> (i32, i32) {
    %c0_i32 = arith.constant 0 : i32
    %c0_i32_0 = arith.constant 0 : i32
    %c0_i32_1 = arith.constant 0 : i32
    return %c0_i32, %c0_i32_0 : i32, i32
  }
  func.func @transform_3(%arg0: i32) -> (i32, i32) {
    %c0_i32 = arith.constant 0 : i32
    %c0_i32_0 = arith.constant 0 : i32
    %c0_i32_1 = arith.constant 0 : i32
    return %c0_i32, %c0_i32_0 : i32, i32
  }
  func.func @transform_4(%arg0: i32) -> (i32, i32) {
    %c0_i32 = arith.constant 0 : i32
    %c0_i32_0 = arith.constant 0 : i32
    %c0_i32_1 = arith.constant 0 : i32
    return %c0_i32, %c0_i32_0 : i32, i32
  }
  func.func @transform_5(%arg0: i32) -> (i32, i32) {
    %c0_i32 = arith.constant 0 : i32
    %c0_i32_0 = arith.constant 0 : i32
    %c0_i32_1 = arith.constant 0 : i32
    return %c0_i32, %c0_i32_0 : i32, i32
  }
  func.func @transform_6(%arg0: i32) -> (i32, i32) {
    %c0_i32 = arith.constant 0 : i32
    %c0_i32_0 = arith.constant 0 : i32
    %c0_i32_1 = arith.constant 0 : i32
    return %c0_i32, %c0_i32_0 : i32, i32
  }
  func.func @transform_7(%arg0: i32) -> (i32, i32) {
    %c0_i32 = arith.constant 0 : i32
    %c0_i32_0 = arith.constant 0 : i32
    return %arg0, %c0_i32 : i32, i32
  }
  func.func @transform_8(%arg0: i32) -> (i32, i32) {
    %c0_i32 = arith.constant 0 : i32
    %c0_i32_0 = arith.constant 0 : i32
    return %arg0, %c0_i32 : i32, i32
  }
  func.func @transform_9(%arg0: i32) -> (i32, i32) {
    %c0_i32 = arith.constant 0 : i32
    %c0_i32_0 = arith.constant 0 : i32
    return %arg0, %c0_i32 : i32, i32
  }
}

module attributes {stable_mosaic.version = 11 : i64} {
  func.func @_topk_mlp_kernel(%arg0: i32, %arg1: memref<8x32xbf16, #tpu.memory_space<vmem>>, %arg2: memref<8x32xf32, #tpu.memory_space<vmem>>, %arg3: memref<32x128xbf16, #tpu.memory_space<vmem>>, %arg4: memref<1x128xf32, #tpu.memory_space<vmem>>, %arg5: memref<128x32xbf16, #tpu.memory_space<vmem>>, %arg6: memref<1x32xf32, #tpu.memory_space<vmem>>, %arg7: memref<128x1xbf16, #tpu.memory_space<vmem>>, %arg8: memref<8x32xf32, #tpu.memory_space<vmem>>, %arg9: memref<8x128xbf16, #tpu.memory_space<vmem>>, %arg10: memref<8x128xf32, #tpu.memory_space<vmem>>) attributes {dimension_semantics = [#tpu.dimension_semantics<parallel>], iteration_bounds = array<i64: 1>, scalar_prefetch = 0 : i64, scratch_operands = 0 : i64, tpu.core_type = #tpu.core_type<tc>, window_params = [{transform_indices = @transform_0, window_bounds = array<i64: 8, 32>}, {transform_indices = @transform_1, window_bounds = array<i64: 8, 32>}, {pipeline_mode = #tpu.pipeline_mode<synchronous>, transform_indices = @transform_2, window_bounds = array<i64: 32, 128>}, {pipeline_mode = #tpu.pipeline_mode<synchronous>, transform_indices = @transform_3, window_bounds = array<i64: 1, 128>}, {pipeline_mode = #tpu.pipeline_mode<synchronous>, transform_indices = @transform_4, window_bounds = array<i64: 128, 32>}, {pipeline_mode = #tpu.pipeline_mode<synchronous>, transform_indices = @transform_5, window_bounds = array<i64: 1, 32>}, {pipeline_mode = #tpu.pipeline_mode<synchronous>, transform_indices = @transform_6, window_bounds = array<i64: 128, 1>}, {transform_indices = @transform_7, window_bounds = array<i64: 8, 32>}, {transform_indices = @transform_8, window_bounds = array<i64: 8, 128>}, {transform_indices = @transform_9, window_bounds = array<i64: 8, 128>}]} {
    %c0 = arith.constant 0 : index
    %c0_0 = arith.constant 0 : index
    %0 = vector.load %arg1[%c0, %c0_0] : memref<8x32xbf16, #tpu.memory_space<vmem>>, vector<8x32xbf16>
    %c0_1 = arith.constant 0 : index
    %c0_2 = arith.constant 0 : index
    %1 = vector.load %arg3[%c0_1, %c0_2] : memref<32x128xbf16, #tpu.memory_space<vmem>>, vector<32x128xbf16>
    %cst = arith.constant dense<0.000000e+00> : vector<8x128xf32>
    %2 = tpu.matmul %0, %1, %cst {dimension_numbers = #tpu.dot_dimension_numbers<[1], [0], [0], [1], [0, 0, 1, 1], [], []>} : vector<8x32xbf16>, vector<32x128xbf16>, vector<8x128xf32> -> vector<8x128xf32>
    %c0_3 = arith.constant 0 : index
    %c0_4 = arith.constant 0 : index
    %3 = vector.load %arg4[%c0_3, %c0_4] : memref<1x128xf32, #tpu.memory_space<vmem>>, vector<1x128xf32>
    %4 = vector.broadcast %3 : vector<1x128xf32> to vector<8x128xf32>
    %5 = arith.addf %2, %4 : vector<8x128xf32>
    %cst_5 = arith.constant 0.000000e+00 : f32
    %6 = vector.broadcast %cst_5 : f32 to vector<8x128xf32>
    %7 = arith.maximumf %5, %6 : vector<8x128xf32>
    %cst_6 = arith.constant dense<0xFF800000> : vector<8xf32>
    %8 = vector.multi_reduction <maximumf>, %7, %cst_6 [1] : vector<8x128xf32> to vector<8xf32>
    %9 = vector.shape_cast %8 : vector<8xf32> to vector<8x1xf32>
    %10 = vector.broadcast %9 : vector<8x1xf32> to vector<8x128xf32>
    %11 = arith.cmpf oeq, %7, %10 : vector<8x128xf32>
    %cst_7 = arith.constant 0xFF800000 : f32
    %12 = vector.broadcast %cst_7 : f32 to vector<8x128xf32>
    %13 = arith.select %11, %12, %7 : vector<8x128xi1>, vector<8x128xf32>
    %cst_8 = arith.constant dense<0xFF800000> : vector<8xf32>
    %14 = vector.multi_reduction <maximumf>, %13, %cst_8 [1] : vector<8x128xf32> to vector<8xf32>
    %15 = vector.shape_cast %14 : vector<8xf32> to vector<8x1xf32>
    %16 = vector.broadcast %15 : vector<8x1xf32> to vector<8x128xf32>
    %17 = arith.cmpf oeq, %13, %16 : vector<8x128xf32>
    %cst_9 = arith.constant 0xFF800000 : f32
    %18 = vector.broadcast %cst_9 : f32 to vector<8x128xf32>
    %19 = arith.select %17, %18, %13 : vector<8x128xi1>, vector<8x128xf32>
    %cst_10 = arith.constant dense<0xFF800000> : vector<8xf32>
    %20 = vector.multi_reduction <maximumf>, %19, %cst_10 [1] : vector<8x128xf32> to vector<8xf32>
    %21 = vector.shape_cast %20 : vector<8xf32> to vector<8x1xf32>
    %22 = vector.broadcast %21 : vector<8x1xf32> to vector<8x128xf32>
    %23 = arith.cmpf oeq, %19, %22 : vector<8x128xf32>
    %cst_11 = arith.constant 0xFF800000 : f32
    %24 = vector.broadcast %cst_11 : f32 to vector<8x128xf32>
    %25 = arith.select %23, %24, %19 : vector<8x128xi1>, vector<8x128xf32>
    %cst_12 = arith.constant dense<0xFF800000> : vector<8xf32>
    %26 = vector.multi_reduction <maximumf>, %25, %cst_12 [1] : vector<8x128xf32> to vector<8xf32>
    %27 = vector.shape_cast %26 : vector<8xf32> to vector<8x1xf32>
    %28 = vector.broadcast %27 : vector<8x1xf32> to vector<8x128xf32>
    %29 = arith.cmpf oeq, %25, %28 : vector<8x128xf32>
    %cst_13 = arith.constant 0xFF800000 : f32
    %30 = vector.broadcast %cst_13 : f32 to vector<8x128xf32>
    %31 = arith.select %29, %30, %25 : vector<8x128xi1>, vector<8x128xf32>
    %cst_14 = arith.constant dense<0xFF800000> : vector<8xf32>
    %32 = vector.multi_reduction <maximumf>, %31, %cst_14 [1] : vector<8x128xf32> to vector<8xf32>
    %33 = vector.shape_cast %32 : vector<8xf32> to vector<8x1xf32>
    %34 = vector.broadcast %33 : vector<8x1xf32> to vector<8x128xf32>
    %35 = arith.cmpf oeq, %31, %34 : vector<8x128xf32>
    %cst_15 = arith.constant 0xFF800000 : f32
    %36 = vector.broadcast %cst_15 : f32 to vector<8x128xf32>
    %37 = arith.select %35, %36, %31 : vector<8x128xi1>, vector<8x128xf32>
    %cst_16 = arith.constant dense<0xFF800000> : vector<8xf32>
    %38 = vector.multi_reduction <maximumf>, %37, %cst_16 [1] : vector<8x128xf32> to vector<8xf32>
    %39 = vector.shape_cast %38 : vector<8xf32> to vector<8x1xf32>
    %40 = vector.broadcast %39 : vector<8x1xf32> to vector<8x128xf32>
    %41 = arith.cmpf oeq, %37, %40 : vector<8x128xf32>
    %cst_17 = arith.constant 0xFF800000 : f32
    %42 = vector.broadcast %cst_17 : f32 to vector<8x128xf32>
    %43 = arith.select %41, %42, %37 : vector<8x128xi1>, vector<8x128xf32>
    %cst_18 = arith.constant dense<0xFF800000> : vector<8xf32>
    %44 = vector.multi_reduction <maximumf>, %43, %cst_18 [1] : vector<8x128xf32> to vector<8xf32>
    %45 = vector.shape_cast %44 : vector<8xf32> to vector<8x1xf32>
    %46 = vector.broadcast %45 : vector<8x1xf32> to vector<8x128xf32>
    %47 = arith.cmpf oeq, %43, %46 : vector<8x128xf32>
    %cst_19 = arith.constant 0xFF800000 : f32
    %48 = vector.broadcast %cst_19 : f32 to vector<8x128xf32>
    %49 = arith.select %47, %48, %43 : vector<8x128xi1>, vector<8x128xf32>
    %cst_20 = arith.constant dense<0xFF800000> : vector<8xf32>
    %50 = vector.multi_reduction <maximumf>, %49, %cst_20 [1] : vector<8x128xf32> to vector<8xf32>
    %51 = vector.shape_cast %50 : vector<8xf32> to vector<8x1xf32>
    %52 = vector.broadcast %51 : vector<8x1xf32> to vector<8x128xf32>
    %53 = arith.cmpf oeq, %49, %52 : vector<8x128xf32>
    %cst_21 = arith.constant 0xFF800000 : f32
    %54 = vector.broadcast %cst_21 : f32 to vector<8x128xf32>
    %55 = arith.select %53, %54, %49 : vector<8x128xi1>, vector<8x128xf32>
    %cst_22 = arith.constant dense<0xFF800000> : vector<8xf32>
    %56 = vector.multi_reduction <maximumf>, %55, %cst_22 [1] : vector<8x128xf32> to vector<8xf32>
    %57 = vector.shape_cast %56 : vector<8xf32> to vector<8x1xf32>
    %58 = vector.broadcast %57 : vector<8x1xf32> to vector<8x128xf32>
    %59 = arith.cmpf oeq, %55, %58 : vector<8x128xf32>
    %cst_23 = arith.constant 0xFF800000 : f32
    %60 = vector.broadcast %cst_23 : f32 to vector<8x128xf32>
    %61 = arith.select %59, %60, %55 : vector<8x128xi1>, vector<8x128xf32>
    %cst_24 = arith.constant dense<0xFF800000> : vector<8xf32>
    %62 = vector.multi_reduction <maximumf>, %61, %cst_24 [1] : vector<8x128xf32> to vector<8xf32>
    %63 = vector.shape_cast %62 : vector<8xf32> to vector<8x1xf32>
    %64 = vector.broadcast %63 : vector<8x1xf32> to vector<8x128xf32>
    %65 = arith.cmpf oeq, %61, %64 : vector<8x128xf32>
    %cst_25 = arith.constant 0xFF800000 : f32
    %66 = vector.broadcast %cst_25 : f32 to vector<8x128xf32>
    %67 = arith.select %65, %66, %61 : vector<8x128xi1>, vector<8x128xf32>
    %cst_26 = arith.constant dense<0xFF800000> : vector<8xf32>
    %68 = vector.multi_reduction <maximumf>, %67, %cst_26 [1] : vector<8x128xf32> to vector<8xf32>
    %69 = vector.shape_cast %68 : vector<8xf32> to vector<8x1xf32>
    %70 = vector.broadcast %69 : vector<8x1xf32> to vector<8x128xf32>
    %71 = arith.cmpf oeq, %67, %70 : vector<8x128xf32>
    %cst_27 = arith.constant 0xFF800000 : f32
    %72 = vector.broadcast %cst_27 : f32 to vector<8x128xf32>
    %73 = arith.select %71, %72, %67 : vector<8x128xi1>, vector<8x128xf32>
    %cst_28 = arith.constant dense<0xFF800000> : vector<8xf32>
    %74 = vector.multi_reduction <maximumf>, %73, %cst_28 [1] : vector<8x128xf32> to vector<8xf32>
    %75 = vector.shape_cast %74 : vector<8xf32> to vector<8x1xf32>
    %76 = vector.broadcast %75 : vector<8x1xf32> to vector<8x128xf32>
    %77 = arith.cmpf oeq, %73, %76 : vector<8x128xf32>
    %cst_29 = arith.constant 0xFF800000 : f32
    %78 = vector.broadcast %cst_29 : f32 to vector<8x128xf32>
    %79 = arith.select %77, %78, %73 : vector<8x128xi1>, vector<8x128xf32>
    %cst_30 = arith.constant dense<0xFF800000> : vector<8xf32>
    %80 = vector.multi_reduction <maximumf>, %79, %cst_30 [1] : vector<8x128xf32> to vector<8xf32>
    %81 = vector.shape_cast %80 : vector<8xf32> to vector<8x1xf32>
    %82 = vector.broadcast %81 : vector<8x1xf32> to vector<8x128xf32>
    %83 = arith.cmpf oeq, %79, %82 : vector<8x128xf32>
    %cst_31 = arith.constant 0xFF800000 : f32
    %84 = vector.broadcast %cst_31 : f32 to vector<8x128xf32>
    %85 = arith.select %83, %84, %79 : vector<8x128xi1>, vector<8x128xf32>
    %cst_32 = arith.constant dense<0xFF800000> : vector<8xf32>
    %86 = vector.multi_reduction <maximumf>, %85, %cst_32 [1] : vector<8x128xf32> to vector<8xf32>
    %87 = vector.shape_cast %86 : vector<8xf32> to vector<8x1xf32>
    %88 = vector.broadcast %87 : vector<8x1xf32> to vector<8x128xf32>
    %89 = arith.cmpf oeq, %85, %88 : vector<8x128xf32>
    %cst_33 = arith.constant 0xFF800000 : f32
    %90 = vector.broadcast %cst_33 : f32 to vector<8x128xf32>
    %91 = arith.select %89, %90, %85 : vector<8x128xi1>, vector<8x128xf32>
    %cst_34 = arith.constant dense<0xFF800000> : vector<8xf32>
    %92 = vector.multi_reduction <maximumf>, %91, %cst_34 [1] : vector<8x128xf32> to vector<8xf32>
    %93 = vector.shape_cast %92 : vector<8xf32> to vector<8x1xf32>
    %94 = vector.broadcast %93 : vector<8x1xf32> to vector<8x128xf32>
    %95 = arith.cmpf oeq, %91, %94 : vector<8x128xf32>
    %cst_35 = arith.constant 0xFF800000 : f32
    %96 = vector.broadcast %cst_35 : f32 to vector<8x128xf32>
    %97 = arith.select %95, %96, %91 : vector<8x128xi1>, vector<8x128xf32>
    %cst_36 = arith.constant dense<0xFF800000> : vector<8xf32>
    %98 = vector.multi_reduction <maximumf>, %97, %cst_36 [1] : vector<8x128xf32> to vector<8xf32>
    %99 = vector.shape_cast %98 : vector<8xf32> to vector<8x1xf32>
    %100 = vector.broadcast %99 : vector<8x1xf32> to vector<8x128xf32>
    %101 = arith.cmpf oge, %7, %100 : vector<8x128xf32>
    %cst_37 = arith.constant 0.000000e+00 : f32
    %102 = vector.broadcast %cst_37 : f32 to vector<8x128xf32>
    %103 = arith.select %101, %7, %102 : vector<8x128xi1>, vector<8x128xf32>
    %104 = arith.truncf %103 : vector<8x128xf32> to vector<8x128xbf16>
    %c0_38 = arith.constant 0 : index
    %c0_39 = arith.constant 0 : index
    %105 = vector.load %arg5[%c0_38, %c0_39] : memref<128x32xbf16, #tpu.memory_space<vmem>>, vector<128x32xbf16>
    %cst_40 = arith.constant dense<0.000000e+00> : vector<8x32xf32>
    %106 = tpu.matmul %104, %105, %cst_40 {dimension_numbers = #tpu.dot_dimension_numbers<[1], [0], [0], [1], [0, 0, 1, 1], [], []>} : vector<8x128xbf16>, vector<128x32xbf16>, vector<8x32xf32> -> vector<8x32xf32>
    %c0_41 = arith.constant 0 : index
    %c0_42 = arith.constant 0 : index
    %107 = vector.load %arg6[%c0_41, %c0_42] : memref<1x32xf32, #tpu.memory_space<vmem>>, vector<1x32xf32>
    %108 = vector.broadcast %107 : vector<1x32xf32> to vector<8x32xf32>
    %109 = arith.addf %106, %108 : vector<8x32xf32>
    %c0_43 = arith.constant 0 : index
    %c0_44 = arith.constant 0 : index
    %110 = vector.load %arg8[%c0_43, %c0_44] : memref<8x32xf32, #tpu.memory_space<vmem>>, vector<8x32xf32>
    tpu.vector_store %arg8[%c0_43, %c0_44], %109 {strides = array<i32>} : memref<8x32xf32, #tpu.memory_space<vmem>>, vector<8x32xf32>,
    %c0_45 = arith.constant 0 : index
    %c0_46 = arith.constant 0 : index
    %111 = vector.load %arg9[%c0_45, %c0_46] : memref<8x128xbf16, #tpu.memory_space<vmem>>, vector<8x128xbf16>
    tpu.vector_store %arg9[%c0_45, %c0_46], %104 {strides = array<i32>} : memref<8x128xbf16, #tpu.memory_space<vmem>>, vector<8x128xbf16>,
    %c0_47 = arith.constant 0 : index
    %c0_48 = arith.constant 0 : index
    %112 = vector.load %arg2[%c0_47, %c0_48] : memref<8x32xf32, #tpu.memory_space<vmem>>, vector<8x32xf32>
    %113 = arith.subf %109, %112 : vector<8x32xf32>
    %114 = arith.mulf %113, %113 : vector<8x32xf32>
    %cst_49 = arith.constant dense<0.000000e+00> : vector<8xf32>
    %115 = vector.multi_reduction <add>, %114, %cst_49 [1] : vector<8x32xf32> to vector<8xf32>
    %116 = vector.shape_cast %115 : vector<8xf32> to vector<8x1xf32>
    %cst_50 = arith.constant dense<0.000000e+00> : vector<1xf32>
    %117 = vector.multi_reduction <add>, %116, %cst_50 [0] : vector<8x1xf32> to vector<1xf32>
    %118 = vector.shape_cast %117 : vector<1xf32> to vector<1x1xf32>
    %c0_51 = arith.constant 0 : index
    %c0_52 = arith.constant 0 : index
    %119 = vector.load %arg7[%c0_51, %c0_52] : memref<128x1xbf16, #tpu.memory_space<vmem>>, vector<128x1xbf16>
    %cst_53 = arith.constant dense<0.000000e+00> : vector<8x1xf32>
    %120 = tpu.matmul %104, %119, %cst_53 {dimension_numbers = #tpu.dot_dimension_numbers<[1], [0], [0], [1], [0, 0, 1, 1], [], []>} : vector<8x128xbf16>, vector<128x1xbf16>, vector<8x1xf32> -> vector<8x1xf32>
    %cst_54 = arith.constant dense<0.000000e+00> : vector<1xf32>
    %121 = vector.multi_reduction <add>, %120, %cst_54 [0] : vector<8x1xf32> to vector<1xf32>
    %122 = vector.shape_cast %121 : vector<1xf32> to vector<1x1xf32>
    %cst_55 = arith.constant 0.000000e+00 : f32
    %123 = vector.broadcast %cst_55 : f32 to vector<8x128xf32>
    %c0_56 = arith.constant 0 : index
    %c0_57 = arith.constant 0 : index
    %124 = vector.load %arg10[%c0_56, %c0_57] : memref<8x128xf32, #tpu.memory_space<vmem>>, vector<8x128xf32>
    tpu.vector_store %arg10[%c0_56, %c0_57], %123 {strides = array<i32>} : memref<8x128xf32, #tpu.memory_space<vmem>>, vector<8x128xf32>,
    %c0_58 = arith.constant 0 : index
    %c0_59 = arith.constant 0 : index
    %125 = vector.load %arg10[%c0_58, %c0_59] : memref<8x128xf32, #tpu.memory_space<vmem>>, vector<1x1xf32>
    tpu.vector_store %arg10[%c0_58, %c0_59], %118 {strides = array<i32>} : memref<8x128xf32, #tpu.memory_space<vmem>>, vector<1x1xf32>,
    %c0_60 = arith.constant 0 : index
    %c1 = arith.constant 1 : index
    %126 = vector.load %arg10[%c0_60, %c1] : memref<8x128xf32, #tpu.memory_space<vmem>>, vector<1x1xf32>
    tpu.vector_store %arg10[%c0_60, %c1], %122 {strides = array<i32>} : memref<8x128xf32, #tpu.memory_space<vmem>>, vector<1x1xf32>,
    return
  }
  func.func @transform_0(%arg0: i32) -> (i32, i32) {
    %c0_i32 = arith.constant 0 : i32
    %c0_i32_0 = arith.constant 0 : i32
    return %arg0, %c0_i32 : i32, i32
  }
  func.func @transform_1(%arg0: i32) -> (i32, i32) {
    %c0_i32 = arith.constant 0 : i32
    %c0_i32_0 = arith.constant 0 : i32
    return %arg0, %c0_i32 : i32, i32
  }
  func.func @transform_2(%arg0: i32) -> (i32, i32) {
    %c0_i32 = arith.constant 0 : i32
    %c0_i32_0 = arith.constant 0 : i32
    %c0_i32_1 = arith.constant 0 : i32
    return %c0_i32, %c0_i32_0 : i32, i32
  }
  func.func @transform_3(%arg0: i32) -> (i32, i32) {
    %c0_i32 = arith.constant 0 : i32
    %c0_i32_0 = arith.constant 0 : i32
    %c0_i32_1 = arith.constant 0 : i32
    return %c0_i32, %c0_i32_0 : i32, i32
  }
  func.func @transform_4(%arg0: i32) -> (i32, i32) {
    %c0_i32 = arith.constant 0 : i32
    %c0_i32_0 = arith.constant 0 : i32
    %c0_i32_1 = arith.constant 0 : i32
    return %c0_i32, %c0_i32_0 : i32, i32
  }
  func.func @transform_5(%arg0: i32) -> (i32, i32) {
    %c0_i32 = arith.constant 0 : i32
    %c0_i32_0 = arith.constant 0 : i32
    %c0_i32_1 = arith.constant 0 : i32
    return %c0_i32, %c0_i32_0 : i32, i32
  }
  func.func @transform_6(%arg0: i32) -> (i32, i32) {
    %c0_i32 = arith.constant 0 : i32
    %c0_i32_0 = arith.constant 0 : i32
    %c0_i32_1 = arith.constant 0 : i32
    return %c0_i32, %c0_i32_0 : i32, i32
  }
  func.func @transform_7(%arg0: i32) -> (i32, i32) {
    %c0_i32 = arith.constant 0 : i32
    %c0_i32_0 = arith.constant 0 : i32
    return %arg0, %c0_i32 : i32, i32
  }
  func.func @transform_8(%arg0: i32) -> (i32, i32) {
    %c0_i32 = arith.constant 0 : i32
    %c0_i32_0 = arith.constant 0 : i32
    return %arg0, %c0_i32 : i32, i32
  }
  func.func @transform_9(%arg0: i32) -> (i32, i32) {
    %c0_i32 = arith.constant 0 : i32
    %c0_i32_0 = arith.constant 0 : i32
    return %arg0, %c0_i32 : i32, i32
  }
}

</mosaic_0001>

<llo_original>
// kernel: tpu_custom_call.1
$region0: #{tpu_custom_call.1}
  #allocation0 [shape = 'u32[]', space=smem, size = 0x4, offset = 0x4, fixed_abs, tag = 'smem constant byte address 0x4 - core index']
  #allocation1 [shape = 'u32[144,128]{1,0:T(1,128)}', space=vmem, size = 0x12000, scoped, tag = 'internal scratch']
  %s0 = inlined_call_operand.vmem [shape: bf16[8,32], index: 0, kind: input, shape index: {}]
  %s1 = inlined_call_operand.vmem [shape: f32[8,32], index: 1, kind: input, shape index: {}]
  %s2 = inlined_call_operand.vmem [shape: bf16[32,128], index: 2, kind: input, shape index: {}]
  %s3 = inlined_call_operand.vmem [shape: f32[1,128], index: 3, kind: input, shape index: {}]
  %s4 = inlined_call_operand.vmem [shape: bf16[128,32], index: 4, kind: input, shape index: {}]
  %s5 = inlined_call_operand.vmem [shape: f32[1,32], index: 5, kind: input, shape index: {}]
  %s6 = inlined_call_operand.vmem [shape: bf16[128,1], index: 6, kind: input, shape index: {}]
  %s7 = inlined_call_operand.hbm [shape: f32[8,32], index: 7, kind: output, shape index: {0}]
  %s8 = inlined_call_operand.hbm [shape: bf16[8,128], index: 8, kind: output, shape index: {1}]
  %s9 = inlined_call_operand.hbm [shape: f32[8,128], index: 9, kind: output, shape index: {2}]
  %10 = xla_tuple %s7, %s8, %s9
  %s11 = sld [smem:[#allocation0]]
  $region54: #{tpu_custom_call.1} parent=0
    _
  %s13 = ssub.s32 1, %s11
  %s14 = scalar_select 0, %s13, %s11
  $region1: #{tpu_custom_call.1} parent=0
    #allocation2 [shape = 'u8[4096]{0}', space=vmem, size = 0x1000, scoped, tag = 'output window, operand 0, single buffered']
    #allocation3 [shape = 's32[1]{0}', space=sflag, size = 0x4, scoped, tag = 'scoped memory for tpu_custom_call.1']
    #allocation4 [shape = 'u8[2048]{0}', space=vmem, size = 0x800, scoped, tag = 'output window, operand 1, single buffered']
    #allocation5 [shape = 's32[1]{0}', space=sflag, size = 0x4, scoped, tag = 'scoped memory for tpu_custom_call.1']
    #allocation6 [shape = 'u8[4096]{0}', space=vmem, size = 0x1000, scoped, tag = 'output window, operand 2, single buffered']
    %15 = vsyncpa [#allocation3], 0
    %16 = vsyncpa [#allocation5], 0
    // Predicated region
    $region2: #{tpu_custom_call.1} parent=1 // pred_check
      _
    $region3: #{tpu_custom_call.1} parent=1 // pred_check_branch
      %18 = sbr.rel (0) target = $region5
    $region4: #{tpu_custom_call.1} parent=1 // pred_region
      _
    $region5: #{tpu_custom_call.1} parent=1 // pred_fallthru
      _
    // Predicated region
    $region6: #{tpu_custom_call.1} parent=1 // pred_check
      _
    $region7: #{tpu_custom_call.1} parent=1 // pred_check_branch
      %20 = sbr.rel (0) target = $region9
    $region8: #{tpu_custom_call.1} parent=1 // pred_region
      _
    $region9: #{tpu_custom_call.1} parent=1 // pred_fallthru
      _
    // Predicated region
    $region10: #{tpu_custom_call.1} parent=1 // pred_check
      _
    $region11: #{tpu_custom_call.1} parent=1 // pred_check_branch
      %22 = sbr.rel (0) target = $region13
    $region12: #{tpu_custom_call.1} parent=1 // pred_region
      _
    $region13: #{tpu_custom_call.1} parent=1 // pred_fallthru
      _
    // Predicated region
    $region14: #{tpu_custom_call.1} parent=1 // pred_check
      _
    $region15: #{tpu_custom_call.1} parent=1 // pred_check_branch
      %24 = sbr.rel (0) target = $region17
    $region16: #{tpu_custom_call.1} parent=1 // pred_region
      _
    $region17: #{tpu_custom_call.1} parent=1 // pred_fallthru
      _
    // Predicated region
    $region18: #{tpu_custom_call.1} parent=1 // pred_check
      _
    $region19: #{tpu_custom_call.1} parent=1 // pred_check_branch
      %26 = sbr.rel (0) target = $region21
    $region20: #{tpu_custom_call.1} parent=1 // pred_region
      _
    $region21: #{tpu_custom_call.1} parent=1 // pred_fallthru
      _
    // Predicated region
    $region22: #{tpu_custom_call.1} parent=1 // pred_check
      _
    $region23: #{tpu_custom_call.1} parent=1 // pred_check_branch
      %28 = sbr.rel (0) target = $region25
    $region24: #{tpu_custom_call.1} parent=1 // pred_region
      _
    $region25: #{tpu_custom_call.1} parent=1 // pred_fallthru
      _
    // Predicated region
    $region26: #{tpu_custom_call.1} parent=1 // pred_check
      _
    $region27: #{tpu_custom_call.1} parent=1 // pred_check_branch
      %30 = sbr.rel (0) target = $region29
    $region28: #{tpu_custom_call.1} parent=1 // pred_region
      _
    $region29: #{tpu_custom_call.1} parent=1 // pred_fallthru
      _
    %v32 = vld [vmem:[%s0] sm:$0xf]
    %v33 = vld [vmem:[%s2] sm:$0xf]
    %v34 = vld [vmem:[%s2 + $0x4] sm:$0xf]
    %v35 = vld [vmem:[%s2 + $0x8] sm:$0xf]
    %v36 = vld [vmem:[%s2 + $0xc] sm:$0xf]
    %v37 = vld [vmem:[%s3] sm:$0x1]
    %v39 = vlaneseq
    %v40 = vshrl.u32 %v39, 7
    %v41 = vsub.s32 0, %v40
    %v42 = vrot.slane %v37, %v41
    %v48 = vunpack.c.l.b16 %v33
    %v49 = vunpack.c.l.b16 %v34
    %v50 = vunpack.c.l.b16 %v35
    %v51 = vunpack.c.l.b16 %v36
    %v52 = vpack.c.b16 %v49, %v48
    %v53 = vpack.c.b16 %v51, %v50
    %vm56 = vcmask 261120
    %v58 = vsel %vm56, %v32, 0
    %60 = vmatprep.subr.bf16.mxu0 0
    %61 = vmatpush1.bf16.msra.mxu0 0
    %62 = vmatprep.subr.bf16.mxu0 0
    %63 = vmatpush1.bf16.msra.mxu0 0
    %64 = vmatprep.subr.bf16.mxu0 0
    %65 = vmatpush1.bf16.msra.mxu0 0
    %66 = vmatprep.subr.bf16.mxu0 0
    %67 = vmatpush1.bf16.msra.mxu0 0
    %68 = vmatprep.subr.bf16.mxu0 0
    %69 = vmatpush1.bf16.msra.mxu0 0
    %70 = vmatprep.subr.bf16.mxu0 0
    %71 = vmatpush1.bf16.msra.mxu0 0
    %72 = vmatprep.subr.bf16.mxu0 0
    %73 = vmatpush1.bf16.msra.mxu0 %v53
    %74 = vmatprep.subr.bf16.mxu0 0
    %75 = vmatpush1.bf16.msra.mxu0 %v52
    %76 = vmatprep.subr.bf16.mxu0 0
    %77 = vmatpush2.bf16.msra.mxu0 0
    %78 = vmatprep.subr.bf16.mxu0 0
    %79 = vmatpush2.bf16.msra.mxu0 0
    %80 = vmatprep.subr.bf16.mxu0 0
    %81 = vmatpush2.bf16.msra.mxu0 0
    %82 = vmatprep.subr.bf16.mxu0 0
    %83 = vmatpush2.bf16.msra.mxu0 0
    %84 = vmatprep.subr.bf16.mxu0 0
    %85 = vmatpush2.bf16.msra.mxu0 0
    %86 = vmatprep.subr.bf16.mxu0 0
    %87 = vmatpush2.bf16.msra.mxu0 0
    %88 = vmatprep.subr.bf16.mxu0 0
    %89 = vmatpush2.bf16.msra.mxu0 0
    %90 = vmatprep.subr.bf16.mxu0 0
    %91 = vmatpush2.bf16.msra.mxu0 0
    %92 = vmatprep.mubr.bf16.mxu0 0
    %93 = vmatmul.mubr.bf16.gmra.mxu0 %v58
    %v94 = vpop.f32.mrf.mxu0
    %v95 = vadd.f32 %v42, %v94
    %v96 = vpop.f32.mrf.mxu0
    %v97 = vpop.f32.mrf.mxu0
    %v98 = vpop.f32.mrf.mxu0
    %99 = vdwg.mxu0
    %v100 = vmax.f32 %v95, 0.0
    %101 = vmax.xlane.f32.xlu0 %v100
    %v102 = vpop.xlane.xlu0 %101
    %vm103 = vcmp.eq.f32.partialorder %v100, %v102
    %v104 = vsel %vm103, -inf, %v100
    %105 = vmax.xlane.f32.xlu0 %v104
    %v106 = vpop.xlane.xlu0 %105
    %vm107 = vcmp.eq.f32.partialorder %v104, %v106
    %v108 = vsel %vm107, -inf, %v104
    %109 = vmax.xlane.f32.xlu0 %v108
    %v110 = vpop.xlane.xlu0 %109
    %vm111 = vcmp.eq.f32.partialorder %v108, %v110
    %v112 = vsel %vm111, -inf, %v108
    %113 = vmax.xlane.f32.xlu0 %v112
    %v114 = vpop.xlane.xlu0 %113
    %vm115 = vcmp.eq.f32.partialorder %v112, %v114
    %v116 = vsel %vm115, -inf, %v112
    %117 = vmax.xlane.f32.xlu0 %v116
    %v118 = vpop.xlane.xlu0 %117
    %vm119 = vcmp.eq.f32.partialorder %v116, %v118
    %v120 = vsel %vm119, -inf, %v116
    %121 = vmax.xlane.f32.xlu0 %v120
    %v122 = vpop.xlane.xlu0 %121
    %vm123 = vcmp.eq.f32.partialorder %v120, %v122
    %v124 = vsel %vm123, -inf, %v120
    %125 = vmax.xlane.f32.xlu0 %v124
    %v126 = vpop.xlane.xlu0 %125
    %vm127 = vcmp.eq.f32.partialorder %v124, %v126
    %v128 = vsel %vm127, -inf, %v124
    %129 = vmax.xlane.f32.xlu0 %v128
    %v130 = vpop.xlane.xlu0 %129
    %vm131 = vcmp.eq.f32.partialorder %v128, %v130
    %v132 = vsel %vm131, -inf, %v128
    %133 = vmax.xlane.f32.xlu0 %v132
    %v134 = vpop.xlane.xlu0 %133
    %vm135 = vcmp.eq.f32.partialorder %v132, %v134
    %v136 = vsel %vm135, -inf, %v132
    %137 = vmax.xlane.f32.xlu0 %v136
    %v138 = vpop.xlane.xlu0 %137
    %vm139 = vcmp.eq.f32.partialorder %v136, %v138
    %v140 = vsel %vm139, -inf, %v136
    %141 = vmax.xlane.f32.xlu0 %v140
    %v142 = vpop.xlane.xlu0 %141
    %vm143 = vcmp.eq.f32.partialorder %v140, %v142
    %v144 = vsel %vm143, -inf, %v140
    %145 = vmax.xlane.f32.xlu0 %v144
    %v146 = vpop.xlane.xlu0 %145
    %vm147 = vcmp.eq.f32.partialorder %v144, %v146
    %v148 = vsel %vm147, -inf, %v144
    %149 = vmax.xlane.f32.xlu0 %v148
    %v150 = vpop.xlane.xlu0 %149
    %vm151 = vcmp.eq.f32.partialorder %v148, %v150
    %v152 = vsel %vm151, -inf, %v148
    %153 = vmax.xlane.f32.xlu0 %v152
    %v154 = vpop.xlane.xlu0 %153
    %vm155 = vcmp.eq.f32.partialorder %v152, %v154
    %v156 = vsel %vm155, -inf, %v152
    %157 = vmax.xlane.f32.xlu0 %v156
    %v158 = vpop.xlane.xlu0 %157
    %vm159 = vcmp.eq.f32.partialorder %v156, %v158
    %v160 = vsel %vm159, -inf, %v156
    %161 = vmax.xlane.f32.xlu0 %v160
    %v162 = vpop.xlane.xlu0 %161
    %vm163 = vcmp.ge.f32.partialorder %v100, %v162
    %v164 = vsel %vm163, %v100, 0.0
    %v165 = vpack.c.bf16 %v164, %v164
    %v166 = vld [vmem:[%s4] sm:$0xf]
    %v167 = vld [vmem:[%s4 + $0x4] sm:$0xf]
    %v168 = vld [vmem:[%s4 + $0x8] sm:$0xf]
    %v169 = vld [vmem:[%s4 + $0xc] sm:$0xf]
    %v170 = vld [vmem:[%s4 + $0x10] sm:$0xf]
    %v171 = vld [vmem:[%s4 + $0x14] sm:$0xf]
    %v172 = vld [vmem:[%s4 + $0x18] sm:$0xf]
    %v173 = vld [vmem:[%s4 + $0x1c] sm:$0xf]
    %v174 = vld [vmem:[%s4 + $0x20] sm:$0xf]
    %v175 = vld [vmem:[%s4 + $0x24] sm:$0xf]
    %v176 = vld [vmem:[%s4 + $0x28] sm:$0xf]
    %v177 = vld [vmem:[%s4 + $0x2c] sm:$0xf]
    %v178 = vld [vmem:[%s4 + $0x30] sm:$0xf]
    %v179 = vld [vmem:[%s4 + $0x34] sm:$0xf]
    %v180 = vld [vmem:[%s4 + $0x38] sm:$0xf]
    %v181 = vld [vmem:[%s4 + $0x3c] sm:$0xf]
    %v182 = vld [vmem:[%s5] sm:$0x1]
    %v184 = vlaneseq
    %v185 = vshrl.u32 %v184, 7
    %v186 = vsub.s32 0, %v185
    %v187 = vrot.slane %v182, %v186
    %v205 = vunpack.c.l.b16 %v166
    %v206 = vunpack.c.l.b16 %v167
    %v207 = vunpack.c.l.b16 %v168
    %v208 = vunpack.c.l.b16 %v169
    %v209 = vunpack.c.l.b16 %v170
    %v210 = vunpack.c.l.b16 %v171
    %v211 = vunpack.c.l.b16 %v172
    %v212 = vunpack.c.l.b16 %v173
    %v213 = vunpack.c.l.b16 %v174
    %v214 = vunpack.c.l.b16 %v175
    %v215 = vunpack.c.l.b16 %v176
    %v216 = vunpack.c.l.b16 %v177
    %v217 = vunpack.c.l.b16 %v178
    %v218 = vunpack.c.l.b16 %v179
    %v219 = vunpack.c.l.b16 %v180
    %v220 = vunpack.c.l.b16 %v181
    %v221 = vpack.c.b16 %v206, %v205
    %v222 = vpack.c.b16 %v208, %v207
    %v223 = vpack.c.b16 %v210, %v209
    %v224 = vpack.c.b16 %v212, %v211
    %v225 = vpack.c.b16 %v214, %v213
    %v226 = vpack.c.b16 %v216, %v215
    %v227 = vpack.c.b16 %v218, %v217
    %v228 = vpack.c.b16 %v220, %v219
    %237 = vmatprep.subr.bf16.mxu0 0
    %238 = vmatpush1.bf16.msra.mxu0 %v228
    %239 = vmatprep.subr.bf16.mxu0 0
    %240 = vmatpush1.bf16.msra.mxu0 %v227
    %241 = vmatprep.subr.bf16.mxu0 0
    %242 = vmatpush1.bf16.msra.mxu0 %v226
    %243 = vmatprep.subr.bf16.mxu0 0
    %244 = vmatpush1.bf16.msra.mxu0 %v225
    %245 = vmatprep.subr.bf16.mxu0 0
    %246 = vmatpush1.bf16.msra.mxu0 %v224
    %247 = vmatprep.subr.bf16.mxu0 0
    %248 = vmatpush1.bf16.msra.mxu0 %v223
    %249 = vmatprep.subr.bf16.mxu0 0
    %250 = vmatpush1.bf16.msra.mxu0 %v222
    %251 = vmatprep.subr.bf16.mxu0 0
    %252 = vmatpush1.bf16.msra.mxu0 %v221
    %253 = vmatprep.subr.bf16.mxu0 0
    %254 = vmatpush2.bf16.msra.mxu0 0
    %255 = vmatprep.subr.bf16.mxu0 0
    %256 = vmatpush2.bf16.msra.mxu0 0
    %257 = vmatprep.subr.bf16.mxu0 0
    %258 = vmatpush2.bf16.msra.mxu0 0
    %259 = vmatprep.subr.bf16.mxu0 0
    %260 = vmatpush2.bf16.msra.mxu0 0
    %261 = vmatprep.subr.bf16.mxu0 0
    %262 = vmatpush2.bf16.msra.mxu0 0
    %263 = vmatprep.subr.bf16.mxu0 0
    %264 = vmatpush2.bf16.msra.mxu0 0
    %265 = vmatprep.subr.bf16.mxu0 0
    %266 = vmatpush2.bf16.msra.mxu0 0
    %267 = vmatprep.subr.bf16.mxu0 0
    %268 = vmatpush2.bf16.msra.mxu0 0
    %269 = vmatprep.mubr.bf16.mxu0 0
    %270 = vmatmul.mubr.bf16.gmra.mxu0 %v165
    %v271 = vpop.f32.mrf.mxu0
    %v272 = vadd.f32 %v187, %v271
    %v273 = vpop.f32.mrf.mxu0
    %v274 = vpop.f32.mrf.mxu0
    %v275 = vpop.f32.mrf.mxu0
    %276 = vdwg.mxu0
    %277 = vst.msk [vmem:[#allocation2] sm:$0xff] %vm56, %v272
    %278 = vst [vmem:[#allocation4] sm:$0xf] %v165
    %v279 = vld [vmem:[%s1] sm:$0xff]
    %v280 = vsub.f32 %v272, %v279
    %v281 = vmul.f32 %v280, %v280
    %v282 = vsel %vm56, %v281, 0.0
    %283 = vadd.xlane.f32.xlu0 %v282
    %v284 = vpop.xlane.xlu0 %283
    %v285 = vrot.slane %v284, 4
    %v286 = vadd.f32 %v284, %v285
    %v287 = vrot.slane %v286, 2
    %v288 = vadd.f32 %v286, %v287
    %v289 = vrot.slane %v288, 1
    %v290 = vadd.f32 %v288, %v289
    %v291 = vld [vmem:[%s6] sm:$0xf]
    %v292 = vld [vmem:[%s6 + $0x4] sm:$0xf]
    %v293 = vld [vmem:[%s6 + $0x8] sm:$0xf]
    %v294 = vld [vmem:[%s6 + $0xc] sm:$0xf]
    %v295 = vld [vmem:[%s6 + $0x10] sm:$0xf]
    %v296 = vld [vmem:[%s6 + $0x14] sm:$0xf]
    %v297 = vld [vmem:[%s6 + $0x18] sm:$0xf]
    %v298 = vld [vmem:[%s6 + $0x1c] sm:$0xf]
    %v299 = vld [vmem:[%s6 + $0x20] sm:$0xf]
    %v300 = vld [vmem:[%s6 + $0x24] sm:$0xf]
    %v301 = vld [vmem:[%s6 + $0x28] sm:$0xf]
    %v302 = vld [vmem:[%s6 + $0x2c] sm:$0xf]
    %v303 = vld [vmem:[%s6 + $0x30] sm:$0xf]
    %v304 = vld [vmem:[%s6 + $0x34] sm:$0xf]
    %v305 = vld [vmem:[%s6 + $0x38] sm:$0xf]
    %v306 = vld [vmem:[%s6 + $0x3c] sm:$0xf]
    %v323 = vunpack.c.l.b16 %v291
    %v324 = vunpack.c.l.b16 %v292
    %v325 = vunpack.c.l.b16 %v293
    %v326 = vunpack.c.l.b16 %v294
    %v327 = vunpack.c.l.b16 %v295
    %v328 = vunpack.c.l.b16 %v296
    %v329 = vunpack.c.l.b16 %v297
    %v330 = vunpack.c.l.b16 %v298
    %v331 = vunpack.c.l.b16 %v299
    %v332 = vunpack.c.l.b16 %v300
    %v333 = vunpack.c.l.b16 %v301
    %v334 = vunpack.c.l.b16 %v302
    %v335 = vunpack.c.l.b16 %v303
    %v336 = vunpack.c.l.b16 %v304
    %v337 = vunpack.c.l.b16 %v305
    %v338 = vunpack.c.l.b16 %v306
    %v339 = vpack.c.b16 %v324, %v323
    %v340 = vpack.c.b16 %v326, %v325
    %v341 = vpack.c.b16 %v328, %v327
    %v342 = vpack.c.b16 %v330, %v329
    %v343 = vpack.c.b16 %v332, %v331
    %v344 = vpack.c.b16 %v334, %v333
    %v345 = vpack.c.b16 %v336, %v335
    %v346 = vpack.c.b16 %v338, %v337
    %355 = vmatprep.subr.bf16.mxu0 0
    %356 = vmatpush1.bf16.msra.mxu0 %v346
    %357 = vmatprep.subr.bf16.mxu0 0
    %358 = vmatpush1.bf16.msra.mxu0 %v345
    %359 = vmatprep.subr.bf16.mxu0 0
    %360 = vmatpush1.bf16.msra.mxu0 %v344
    %361 = vmatprep.subr.bf16.mxu0 0
    %362 = vmatpush1.bf16.msra.mxu0 %v343
    %363 = vmatprep.subr.bf16.mxu0 0
    %364 = vmatpush1.bf16.msra.mxu0 %v342
    %365 = vmatprep.subr.bf16.mxu0 0
    %366 = vmatpush1.bf16.msra.mxu0 %v341
    %367 = vmatprep.subr.bf16.mxu0 0
    %368 = vmatpush1.bf16.msra.mxu0 %v340
    %369 = vmatprep.subr.bf16.mxu0 0
    %370 = vmatpush1.bf16.msra.mxu0 %v339
    %371 = vmatprep.subr.bf16.mxu0 0
    %372 = vmatpush2.bf16.msra.mxu0 0
    %373 = vmatprep.subr.bf16.mxu0 0
    %374 = vmatpush2.bf16.msra.mxu0 0
    %375 = vmatprep.subr.bf16.mxu0 0
    %376 = vmatpush2.bf16.msra.mxu0 0
    %377 = vmatprep.subr.bf16.mxu0 0
    %378 = vmatpush2.bf16.msra.mxu0 0
    %379 = vmatprep.subr.bf16.mxu0 0
    %380 = vmatpush2.bf16.msra.mxu0 0
    %381 = vmatprep.subr.bf16.mxu0 0
    %382 = vmatpush2.bf16.msra.mxu0 0
    %383 = vmatprep.subr.bf16.mxu0 0
    %384 = vmatpush2.bf16.msra.mxu0 0
    %385 = vmatprep.subr.bf16.mxu0 0
    %386 = vmatpush2.bf16.msra.mxu0 0
    %387 = vmatprep.mubr.bf16.mxu0 0
    %388 = vmatmul.mubr.bf16.gmra.mxu0 %v165
    %v389 = vpop.f32.mrf.mxu0
    %v390 = vadd.f32 0.0, %v389
    %v391 = vpop.f32.mrf.mxu0
    %v392 = vpop.f32.mrf.mxu0
    %v393 = vpop.f32.mrf.mxu0
    %394 = vdwg.mxu0
    %vm395 = vcmask 7168
    %v396 = vsel %vm395, %v390, 0.0
    %v397 = vrot.slane %v396, 4
    %v398 = vadd.f32 %v396, %v397
    %v399 = vrot.slane %v398, 2
    %v400 = vadd.f32 %v398, %v399
    %v401 = vrot.slane %v400, 1
    %v402 = vadd.f32 %v400, %v401
    %403 = vst [vmem:[#allocation6] sm:$0xff] 0.0
    %vm404 = vcmask 0
    %405 = vst.msk [vmem:[#allocation6] sm:$0x1] %vm404, %v290
    %407 = vrot.lane.b32.xlu0 %v402, 1
    %v408 = vpop.permute.xlu0 %407
    %vm410 = vcmask 8200
    %411 = vst.msk [vmem:[#allocation6] sm:$0x1] %vm410, %v408
    // Predicated region
    $region30: #{tpu_custom_call.1} parent=1 // pred_check
      _
    $region31: #{tpu_custom_call.1} parent=1 // pred_check_branch
      %413 = sbr.rel (0) target = $region33
    $region32: #{tpu_custom_call.1} parent=1 // pred_region
      %s415 = ssub.s32 128, 128
      %416 = vsyncadd [#allocation3], %s415
      %s418 = sshll.u32 [#allocation2], 4
      %s419 = int_to_ptr.vmem [resolvable:$true] %s418
      %421 = dma.vmem_to_hbm [thread:$0]  %s419, 128, %s7, [#allocation3]
    $region33: #{tpu_custom_call.1} parent=1 // pred_fallthru
      _
    // Predicated region
    $region34: #{tpu_custom_call.1} parent=1 // pred_check
      _
    $region35: #{tpu_custom_call.1} parent=1 // pred_check_branch
      %423 = sbr.rel (0) target = $region37
    $region36: #{tpu_custom_call.1} parent=1 // pred_region
      %s425 = ssub.s32 64, 64
      %426 = vsyncadd [#allocation5], %s425
      %s428 = sshll.u32 [#allocation4], 4
      %s429 = int_to_ptr.vmem [resolvable:$true] %s428
      %431 = dma.vmem_to_hbm [thread:$0]  %s429, 64, %s8, [#allocation5]
    $region37: #{tpu_custom_call.1} parent=1 // pred_fallthru
      _
    // Predicated region
    $region38: #{tpu_custom_call.1} parent=1 // pred_check
      _
    $region39: #{tpu_custom_call.1} parent=1 // pred_check_branch
      %433 = sbr.rel (0) target = $region41
    $region40: #{tpu_custom_call.1} parent=1 // pred_region
      %s435 = ssub.s32 128, 128
      %436 = vsyncadd [#allocation5], %s435
      %s438 = sshll.u32 [#allocation6], 4
      %s439 = int_to_ptr.vmem [resolvable:$true] %s438
      %441 = dma.vmem_to_hbm [thread:$0]  %s439, 128, %s9, [#allocation5]
    $region41: #{tpu_custom_call.1} parent=1 // pred_fallthru
      _
    // Predicated region
    $region42: #{tpu_custom_call.1} parent=1 // pred_check
      _
    $region43: #{tpu_custom_call.1} parent=1 // pred_check_branch
      %443 = sbr.rel (0) target = $region45
    $region44: #{tpu_custom_call.1} parent=1 // pred_region
      %444 = dma.done [#allocation3], 128
    $region45: #{tpu_custom_call.1} parent=1 // pred_fallthru
      _
    // Predicated region
    $region46: #{tpu_custom_call.1} parent=1 // pred_check
      _
    $region47: #{tpu_custom_call.1} parent=1 // pred_check_branch
      %446 = sbr.rel (0) target = $region49
    $region48: #{tpu_custom_call.1} parent=1 // pred_region
      %447 = dma.done [#allocation5], 64
    $region49: #{tpu_custom_call.1} parent=1 // pred_fallthru
      _
    // Predicated region
    $region50: #{tpu_custom_call.1} parent=1 // pred_check
      _
    $region51: #{tpu_custom_call.1} parent=1 // pred_check_branch
      %449 = sbr.rel (0) target = $region53
    $region52: #{tpu_custom_call.1} parent=1 // pred_region
      %450 = dma.done [#allocation5], 128
    $region53: #{tpu_custom_call.1} parent=1 // pred_fallthru
      _
    %451 = vsyncpa [#allocation3], 1
    %452 = vsyncpa [#allocation5], 1

// kernel: tpu_custom_call.1
$region0: #{tpu_custom_call.1}
  #allocation0 [shape = 'u32[]', space=smem, size = 0x4, offset = 0x4, fixed_abs, tag = 'smem constant byte address 0x4 - core index']
  #allocation1 [shape = 'u32[144,128]{1,0:T(1,128)}', space=vmem, size = 0x12000, scoped, tag = 'internal scratch']
  %s0 = inlined_call_operand.vmem [shape: bf16[8,32], index: 0, kind: input, shape index: {}]
  %s1 = inlined_call_operand.vmem [shape: f32[8,32], index: 1, kind: input, shape index: {}]
  %s2 = inlined_call_operand.vmem [shape: bf16[32,128], index: 2, kind: input, shape index: {}]
  %s3 = inlined_call_operand.vmem [shape: f32[1,128], index: 3, kind: input, shape index: {}]
  %s4 = inlined_call_operand.vmem [shape: bf16[128,32], index: 4, kind: input, shape index: {}]
  %s5 = inlined_call_operand.vmem [shape: f32[1,32], index: 5, kind: input, shape index: {}]
  %s6 = inlined_call_operand.vmem [shape: bf16[128,1], index: 6, kind: input, shape index: {}]
  %s7 = inlined_call_operand.hbm [shape: f32[8,32], index: 7, kind: output, shape index: {0}]
  %s8 = inlined_call_operand.hbm [shape: bf16[8,128], index: 8, kind: output, shape index: {1}]
  %s9 = inlined_call_operand.hbm [shape: f32[8,128], index: 9, kind: output, shape index: {2}]
  %10 = xla_tuple %s7, %s8, %s9
  %s11 = sld [smem:[#allocation0]]
  $region54: #{tpu_custom_call.1} parent=0
    _
  %s13 = ssub.s32 1, %s11
  %s14 = scalar_select 0, %s13, %s11
  $region1: #{tpu_custom_call.1} parent=0
    #allocation2 [shape = 'u8[4096]{0}', space=vmem, size = 0x1000, scoped, tag = 'output window, operand 0, single buffered']
    #allocation3 [shape = 's32[1]{0}', space=sflag, size = 0x4, scoped, tag = 'scoped memory for tpu_custom_call.1']
    #allocation4 [shape = 'u8[2048]{0}', space=vmem, size = 0x800, scoped, tag = 'output window, operand 1, single buffered']
    #allocation5 [shape = 's32[1]{0}', space=sflag, size = 0x4, scoped, tag = 'scoped memory for tpu_custom_call.1']
    #allocation6 [shape = 'u8[4096]{0}', space=vmem, size = 0x1000, scoped, tag = 'output window, operand 2, single buffered']
    %15 = vsyncpa [#allocation3], 0
    %16 = vsyncpa [#allocation5], 0
    // Predicated region
    $region2: #{tpu_custom_call.1} parent=1 // pred_check
      _
    $region3: #{tpu_custom_call.1} parent=1 // pred_check_branch
      %18 = sbr.rel (0) target = $region5
    $region4: #{tpu_custom_call.1} parent=1 // pred_region
      _
    $region5: #{tpu_custom_call.1} parent=1 // pred_fallthru
      _
    // Predicated region
    $region6: #{tpu_custom_call.1} parent=1 // pred_check
      _
    $region7: #{tpu_custom_call.1} parent=1 // pred_check_branch
      %20 = sbr.rel (0) target = $region9
    $region8: #{tpu_custom_call.1} parent=1 // pred_region
      _
    $region9: #{tpu_custom_call.1} parent=1 // pred_fallthru
      _
    // Predicated region
    $region10: #{tpu_custom_call.1} parent=1 // pred_check
      _
    $region11: #{tpu_custom_call.1} parent=1 // pred_check_branch
      %22 = sbr.rel (0) target = $region13
    $region12: #{tpu_custom_call.1} parent=1 // pred_region
      _
    $region13: #{tpu_custom_call.1} parent=1 // pred_fallthru
      _
    // Predicated region
    $region14: #{tpu_custom_call.1} parent=1 // pred_check
      _
    $region15: #{tpu_custom_call.1} parent=1 // pred_check_branch
      %24 = sbr.rel (0) target = $region17
    $region16: #{tpu_custom_call.1} parent=1 // pred_region
      _
    $region17: #{tpu_custom_call.1} parent=1 // pred_fallthru
      _
    // Predicated region
    $region18: #{tpu_custom_call.1} parent=1 // pred_check
      _
    $region19: #{tpu_custom_call.1} parent=1 // pred_check_branch
      %26 = sbr.rel (0) target = $region21
    $region20: #{tpu_custom_call.1} parent=1 // pred_region
      _
    $region21: #{tpu_custom_call.1} parent=1 // pred_fallthru
      _
    // Predicated region
    $region22: #{tpu_custom_call.1} parent=1 // pred_check
      _
    $region23: #{tpu_custom_call.1} parent=1 // pred_check_branch
      %28 = sbr.rel (0) target = $region25
    $region24: #{tpu_custom_call.1} parent=1 // pred_region
      _
    $region25: #{tpu_custom_call.1} parent=1 // pred_fallthru
      _
    // Predicated region
    $region26: #{tpu_custom_call.1} parent=1 // pred_check
      _
    $region27: #{tpu_custom_call.1} parent=1 // pred_check_branch
      %30 = sbr.rel (0) target = $region29
    $region28: #{tpu_custom_call.1} parent=1 // pred_region
      _
    $region29: #{tpu_custom_call.1} parent=1 // pred_fallthru
      _
    %v32 = vld [vmem:[%s0] sm:$0xf]
    %v33 = vld [vmem:[%s2] sm:$0xf]
    %v34 = vld [vmem:[%s2 + $0x4] sm:$0xf]
    %v35 = vld [vmem:[%s2 + $0x8] sm:$0xf]
    %v36 = vld [vmem:[%s2 + $0xc] sm:$0xf]
    %v37 = vld [vmem:[%s3] sm:$0x1]
    %v39 = vlaneseq
    %v40 = vshrl.u32 %v39, 7
    %v41 = vsub.s32 0, %v40
    %v42 = vrot.slane %v37, %v41
    %v48 = vunpack.c.l.b16 %v33
    %v49 = vunpack.c.l.b16 %v34
    %v50 = vunpack.c.l.b16 %v35
    %v51 = vunpack.c.l.b16 %v36
    %v52 = vpack.c.b16 %v49, %v48
    %v53 = vpack.c.b16 %v51, %v50
    %vm56 = vcmask 261120
    %v58 = vsel %vm56, %v32, 0
    %60 = vmatprep.subr.bf16.mxu0 0
    %61 = vmatpush1.bf16.msra.mxu0 0
    %62 = vmatprep.subr.bf16.mxu0 0
    %63 = vmatpush1.bf16.msra.mxu0 0
    %64 = vmatprep.subr.bf16.mxu0 0
    %65 = vmatpush1.bf16.msra.mxu0 0
    %66 = vmatprep.subr.bf16.mxu0 0
    %67 = vmatpush1.bf16.msra.mxu0 0
    %68 = vmatprep.subr.bf16.mxu0 0
    %69 = vmatpush1.bf16.msra.mxu0 0
    %70 = vmatprep.subr.bf16.mxu0 0
    %71 = vmatpush1.bf16.msra.mxu0 0
    %72 = vmatprep.subr.bf16.mxu0 0
    %73 = vmatpush1.bf16.msra.mxu0 %v53
    %74 = vmatprep.subr.bf16.mxu0 0
    %75 = vmatpush1.bf16.msra.mxu0 %v52
    %76 = vmatprep.subr.bf16.mxu0 0
    %77 = vmatpush2.bf16.msra.mxu0 0
    %78 = vmatprep.subr.bf16.mxu0 0
    %79 = vmatpush2.bf16.msra.mxu0 0
    %80 = vmatprep.subr.bf16.mxu0 0
    %81 = vmatpush2.bf16.msra.mxu0 0
    %82 = vmatprep.subr.bf16.mxu0 0
    %83 = vmatpush2.bf16.msra.mxu0 0
    %84 = vmatprep.subr.bf16.mxu0 0
    %85 = vmatpush2.bf16.msra.mxu0 0
    %86 = vmatprep.subr.bf16.mxu0 0
    %87 = vmatpush2.bf16.msra.mxu0 0
    %88 = vmatprep.subr.bf16.mxu0 0
    %89 = vmatpush2.bf16.msra.mxu0 0
    %90 = vmatprep.subr.bf16.mxu0 0
    %91 = vmatpush2.bf16.msra.mxu0 0
    %92 = vmatprep.mubr.bf16.mxu0 0
    %93 = vmatmul.mubr.bf16.gmra.mxu0 %v58
    %v94 = vpop.f32.mrf.mxu0
    %v95 = vadd.f32 %v42, %v94
    %v96 = vpop.f32.mrf.mxu0
    %v97 = vpop.f32.mrf.mxu0
    %v98 = vpop.f32.mrf.mxu0
    %99 = vdwg.mxu0
    %v100 = vmax.f32 %v95, 0.0
    %101 = vmax.xlane.f32.xlu0 %v100
    %v102 = vpop.xlane.xlu0 %101
    %vm103 = vcmp.eq.f32.partialorder %v100, %v102
    %v104 = vsel %vm103, -inf, %v100
    %105 = vmax.xlane.f32.xlu0 %v104
    %v106 = vpop.xlane.xlu0 %105
    %vm107 = vcmp.eq.f32.partialorder %v104, %v106
    %v108 = vsel %vm107, -inf, %v104
    %109 = vmax.xlane.f32.xlu0 %v108
    %v110 = vpop.xlane.xlu0 %109
    %vm111 = vcmp.eq.f32.partialorder %v108, %v110
    %v112 = vsel %vm111, -inf, %v108
    %113 = vmax.xlane.f32.xlu0 %v112
    %v114 = vpop.xlane.xlu0 %113
    %vm115 = vcmp.eq.f32.partialorder %v112, %v114
    %v116 = vsel %vm115, -inf, %v112
    %117 = vmax.xlane.f32.xlu0 %v116
    %v118 = vpop.xlane.xlu0 %117
    %vm119 = vcmp.eq.f32.partialorder %v116, %v118
    %v120 = vsel %vm119, -inf, %v116
    %121 = vmax.xlane.f32.xlu0 %v120
    %v122 = vpop.xlane.xlu0 %121
    %vm123 = vcmp.eq.f32.partialorder %v120, %v122
    %v124 = vsel %vm123, -inf, %v120
    %125 = vmax.xlane.f32.xlu0 %v124
    %v126 = vpop.xlane.xlu0 %125
    %vm127 = vcmp.eq.f32.partialorder %v124, %v126
    %v128 = vsel %vm127, -inf, %v124
    %129 = vmax.xlane.f32.xlu0 %v128
    %v130 = vpop.xlane.xlu0 %129
    %vm131 = vcmp.eq.f32.partialorder %v128, %v130
    %v132 = vsel %vm131, -inf, %v128
    %133 = vmax.xlane.f32.xlu0 %v132
    %v134 = vpop.xlane.xlu0 %133
    %vm135 = vcmp.eq.f32.partialorder %v132, %v134
    %v136 = vsel %vm135, -inf, %v132
    %137 = vmax.xlane.f32.xlu0 %v136
    %v138 = vpop.xlane.xlu0 %137
    %vm139 = vcmp.eq.f32.partialorder %v136, %v138
    %v140 = vsel %vm139, -inf, %v136
    %141 = vmax.xlane.f32.xlu0 %v140
    %v142 = vpop.xlane.xlu0 %141
    %vm143 = vcmp.eq.f32.partialorder %v140, %v142
    %v144 = vsel %vm143, -inf, %v140
    %145 = vmax.xlane.f32.xlu0 %v144
    %v146 = vpop.xlane.xlu0 %145
    %vm147 = vcmp.eq.f32.partialorder %v144, %v146
    %v148 = vsel %vm147, -inf, %v144
    %149 = vmax.xlane.f32.xlu0 %v148
    %v150 = vpop.xlane.xlu0 %149
    %vm151 = vcmp.eq.f32.partialorder %v148, %v150
    %v152 = vsel %vm151, -inf, %v148
    %153 = vmax.xlane.f32.xlu0 %v152
    %v154 = vpop.xlane.xlu0 %153
    %vm155 = vcmp.eq.f32.partialorder %v152, %v154
    %v156 = vsel %vm155, -inf, %v152
    %157 = vmax.xlane.f32.xlu0 %v156
    %v158 = vpop.xlane.xlu0 %157
    %vm159 = vcmp.eq.f32.partialorder %v156, %v158
    %v160 = vsel %vm159, -inf, %v156
    %161 = vmax.xlane.f32.xlu0 %v160
    %v162 = vpop.xlane.xlu0 %161
    %vm163 = vcmp.ge.f32.partialorder %v100, %v162
    %v164 = vsel %vm163, %v100, 0.0
    %v165 = vpack.c.bf16 %v164, %v164
    %v166 = vld [vmem:[%s4] sm:$0xf]
    %v167 = vld [vmem:[%s4 + $0x4] sm:$0xf]
    %v168 = vld [vmem:[%s4 + $0x8] sm:$0xf]
    %v169 = vld [vmem:[%s4 + $0xc] sm:$0xf]
    %v170 = vld [vmem:[%s4 + $0x10] sm:$0xf]
    %v171 = vld [vmem:[%s4 + $0x14] sm:$0xf]
    %v172 = vld [vmem:[%s4 + $0x18] sm:$0xf]
    %v173 = vld [vmem:[%s4 + $0x1c] sm:$0xf]
    %v174 = vld [vmem:[%s4 + $0x20] sm:$0xf]
    %v175 = vld [vmem:[%s4 + $0x24] sm:$0xf]
    %v176 = vld [vmem:[%s4 + $0x28] sm:$0xf]
    %v177 = vld [vmem:[%s4 + $0x2c] sm:$0xf]
    %v178 = vld [vmem:[%s4 + $0x30] sm:$0xf]
    %v179 = vld [vmem:[%s4 + $0x34] sm:$0xf]
    %v180 = vld [vmem:[%s4 + $0x38] sm:$0xf]
    %v181 = vld [vmem:[%s4 + $0x3c] sm:$0xf]
    %v182 = vld [vmem:[%s5] sm:$0x1]
    %v184 = vlaneseq
    %v185 = vshrl.u32 %v184, 7
    %v186 = vsub.s32 0, %v185
    %v187 = vrot.slane %v182, %v186
    %v205 = vunpack.c.l.b16 %v166
    %v206 = vunpack.c.l.b16 %v167
    %v207 = vunpack.c.l.b16 %v168
    %v208 = vunpack.c.l.b16 %v169
    %v209 = vunpack.c.l.b16 %v170
    %v210 = vunpack.c.l.b16 %v171
    %v211 = vunpack.c.l.b16 %v172
    %v212 = vunpack.c.l.b16 %v173
    %v213 = vunpack.c.l.b16 %v174
    %v214 = vunpack.c.l.b16 %v175
    %v215 = vunpack.c.l.b16 %v176
    %v216 = vunpack.c.l.b16 %v177
    %v217 = vunpack.c.l.b16 %v178
    %v218 = vunpack.c.l.b16 %v179
    %v219 = vunpack.c.l.b16 %v180
    %v220 = vunpack.c.l.b16 %v181
    %v221 = vpack.c.b16 %v206, %v205
    %v222 = vpack.c.b16 %v208, %v207
    %v223 = vpack.c.b16 %v210, %v209
    %v224 = vpack.c.b16 %v212, %v211
    %v225 = vpack.c.b16 %v214, %v213
    %v226 = vpack.c.b16 %v216, %v215
    %v227 = vpack.c.b16 %v218, %v217
    %v228 = vpack.c.b16 %v220, %v219
    %237 = vmatprep.subr.bf16.mxu0 0
    %238 = vmatpush1.bf16.msra.mxu0 %v228
    %239 = vmatprep.subr.bf16.mxu0 0
    %240 = vmatpush1.bf16.msra.mxu0 %v227
    %241 = vmatprep.subr.bf16.mxu0 0
    %242 = vmatpush1.bf16.msra.mxu0 %v226
    %243 = vmatprep.subr.bf16.mxu0 0
    %244 = vmatpush1.bf16.msra.mxu0 %v225
    %245 = vmatprep.subr.bf16.mxu0 0
    %246 = vmatpush1.bf16.msra.mxu0 %v224
    %247 = vmatprep.subr.bf16.mxu0 0
    %248 = vmatpush1.bf16.msra.mxu0 %v223
    %249 = vmatprep.subr.bf16.mxu0 0
    %250 = vmatpush1.bf16.msra.mxu0 %v222
    %251 = vmatprep.subr.bf16.mxu0 0
    %252 = vmatpush1.bf16.msra.mxu0 %v221
    %253 = vmatprep.subr.bf16.mxu0 0
    %254 = vmatpush2.bf16.msra.mxu0 0
    %255 = vmatprep.subr.bf16.mxu0 0
    %256 = vmatpush2.bf16.msra.mxu0 0
    %257 = vmatprep.subr.bf16.mxu0 0
    %258 = vmatpush2.bf16.msra.mxu0 0
    %259 = vmatprep.subr.bf16.mxu0 0
    %260 = vmatpush2.bf16.msra.mxu0 0
    %261 = vmatprep.subr.bf16.mxu0 0
    %262 = vmatpush2.bf16.msra.mxu0 0
    %263 = vmatprep.subr.bf16.mxu0 0
    %264 = vmatpush2.bf16.msra.mxu0 0
    %265 = vmatprep.subr.bf16.mxu0 0
    %266 = vmatpush2.bf16.msra.mxu0 0
    %267 = vmatprep.subr.bf16.mxu0 0
    %268 = vmatpush2.bf16.msra.mxu0 0
    %269 = vmatprep.mubr.bf16.mxu0 0
    %270 = vmatmul.mubr.bf16.gmra.mxu0 %v165
    %v271 = vpop.f32.mrf.mxu0
    %v272 = vadd.f32 %v187, %v271
    %v273 = vpop.f32.mrf.mxu0
    %v274 = vpop.f32.mrf.mxu0
    %v275 = vpop.f32.mrf.mxu0
    %276 = vdwg.mxu0
    %277 = vst.msk [vmem:[#allocation2] sm:$0xff] %vm56, %v272
    %278 = vst [vmem:[#allocation4] sm:$0xf] %v165
    %v279 = vld [vmem:[%s1] sm:$0xff]
    %v280 = vsub.f32 %v272, %v279
    %v281 = vmul.f32 %v280, %v280
    %v282 = vsel %vm56, %v281, 0.0
    %283 = vadd.xlane.f32.xlu0 %v282
    %v284 = vpop.xlane.xlu0 %283
    %v285 = vrot.slane %v284, 4
    %v286 = vadd.f32 %v284, %v285
    %v287 = vrot.slane %v286, 2
    %v288 = vadd.f32 %v286, %v287
    %v289 = vrot.slane %v288, 1
    %v290 = vadd.f32 %v288, %v289
    %v291 = vld [vmem:[%s6] sm:$0xf]
    %v292 = vld [vmem:[%s6 + $0x4] sm:$0xf]
    %v293 = vld [vmem:[%s6 + $0x8] sm:$0xf]
    %v294 = vld [vmem:[%s6 + $0xc] sm:$0xf]
    %v295 = vld [vmem:[%s6 + $0x10] sm:$0xf]
    %v296 = vld [vmem:[%s6 + $0x14] sm:$0xf]
    %v297 = vld [vmem:[%s6 + $0x18] sm:$0xf]
    %v298 = vld [vmem:[%s6 + $0x1c] sm:$0xf]
    %v299 = vld [vmem:[%s6 + $0x20] sm:$0xf]
    %v300 = vld [vmem:[%s6 + $0x24] sm:$0xf]
    %v301 = vld [vmem:[%s6 + $0x28] sm:$0xf]
    %v302 = vld [vmem:[%s6 + $0x2c] sm:$0xf]
    %v303 = vld [vmem:[%s6 + $0x30] sm:$0xf]
    %v304 = vld [vmem:[%s6 + $0x34] sm:$0xf]
    %v305 = vld [vmem:[%s6 + $0x38] sm:$0xf]
    %v306 = vld [vmem:[%s6 + $0x3c] sm:$0xf]
    %v323 = vunpack.c.l.b16 %v291
    %v324 = vunpack.c.l.b16 %v292
    %v325 = vunpack.c.l.b16 %v293
    %v326 = vunpack.c.l.b16 %v294
    %v327 = vunpack.c.l.b16 %v295
    %v328 = vunpack.c.l.b16 %v296
    %v329 = vunpack.c.l.b16 %v297
    %v330 = vunpack.c.l.b16 %v298
    %v331 = vunpack.c.l.b16 %v299
    %v332 = vunpack.c.l.b16 %v300
    %v333 = vunpack.c.l.b16 %v301
    %v334 = vunpack.c.l.b16 %v302
    %v335 = vunpack.c.l.b16 %v303
    %v336 = vunpack.c.l.b16 %v304
    %v337 = vunpack.c.l.b16 %v305
    %v338 = vunpack.c.l.b16 %v306
    %v339 = vpack.c.b16 %v324, %v323
    %v340 = vpack.c.b16 %v326, %v325
    %v341 = vpack.c.b16 %v328, %v327
    %v342 = vpack.c.b16 %v330, %v329
    %v343 = vpack.c.b16 %v332, %v331
    %v344 = vpack.c.b16 %v334, %v333
    %v345 = vpack.c.b16 %v336, %v335
    %v346 = vpack.c.b16 %v338, %v337
    %355 = vmatprep.subr.bf16.mxu0 0
    %356 = vmatpush1.bf16.msra.mxu0 %v346
    %357 = vmatprep.subr.bf16.mxu0 0
    %358 = vmatpush1.bf16.msra.mxu0 %v345
    %359 = vmatprep.subr.bf16.mxu0 0
    %360 = vmatpush1.bf16.msra.mxu0 %v344
    %361 = vmatprep.subr.bf16.mxu0 0
    %362 = vmatpush1.bf16.msra.mxu0 %v343
    %363 = vmatprep.subr.bf16.mxu0 0
    %364 = vmatpush1.bf16.msra.mxu0 %v342
    %365 = vmatprep.subr.bf16.mxu0 0
    %366 = vmatpush1.bf16.msra.mxu0 %v341
    %367 = vmatprep.subr.bf16.mxu0 0
    %368 = vmatpush1.bf16.msra.mxu0 %v340
    %369 = vmatprep.subr.bf16.mxu0 0
    %370 = vmatpush1.bf16.msra.mxu0 %v339
    %371 = vmatprep.subr.bf16.mxu0 0
    %372 = vmatpush2.bf16.msra.mxu0 0
    %373 = vmatprep.subr.bf16.mxu0 0
    %374 = vmatpush2.bf16.msra.mxu0 0
    %375 = vmatprep.subr.bf16.mxu0 0
    %376 = vmatpush2.bf16.msra.mxu0 0
    %377 = vmatprep.subr.bf16.mxu0 0
    %378 = vmatpush2.bf16.msra.mxu0 0
    %379 = vmatprep.subr.bf16.mxu0 0
    %380 = vmatpush2.bf16.msra.mxu0 0
    %381 = vmatprep.subr.bf16.mxu0 0
    %382 = vmatpush2.bf16.msra.mxu0 0
    %383 = vmatprep.subr.bf16.mxu0 0
    %384 = vmatpush2.bf16.msra.mxu0 0
    %385 = vmatprep.subr.bf16.mxu0 0
    %386 = vmatpush2.bf16.msra.mxu0 0
    %387 = vmatprep.mubr.bf16.mxu0 0
    %388 = vmatmul.mubr.bf16.gmra.mxu0 %v165
    %v389 = vpop.f32.mrf.mxu0
    %v390 = vadd.f32 0.0, %v389
    %v391 = vpop.f32.mrf.mxu0
    %v392 = vpop.f32.mrf.mxu0
    %v393 = vpop.f32.mrf.mxu0
    %394 = vdwg.mxu0
    %vm395 = vcmask 7168
    %v396 = vsel %vm395, %v390, 0.0
    %v397 = vrot.slane %v396, 4
    %v398 = vadd.f32 %v396, %v397
    %v399 = vrot.slane %v398, 2
    %v400 = vadd.f32 %v398, %v399
    %v401 = vrot.slane %v400, 1
    %v402 = vadd.f32 %v400, %v401
    %403 = vst [vmem:[#allocation6] sm:$0xff] 0.0
    %vm404 = vcmask 0
    %405 = vst.msk [vmem:[#allocation6] sm:$0x1] %vm404, %v290
    %407 = vrot.lane.b32.xlu0 %v402, 1
    %v408 = vpop.permute.xlu0 %407
    %vm410 = vcmask 8200
    %411 = vst.msk [vmem:[#allocation6] sm:$0x1] %vm410, %v408
    // Predicated region
    $region30: #{tpu_custom_call.1} parent=1 // pred_check
      _
    $region31: #{tpu_custom_call.1} parent=1 // pred_check_branch
      %413 = sbr.rel (0) target = $region33
    $region32: #{tpu_custom_call.1} parent=1 // pred_region
      %s415 = ssub.s32 128, 128
      %416 = vsyncadd [#allocation3], %s415
      %s418 = sshll.u32 [#allocation2], 4
      %s419 = int_to_ptr.vmem [resolvable:$true] %s418
      %421 = dma.vmem_to_hbm [thread:$0]  %s419, 128, %s7, [#allocation3]
    $region33: #{tpu_custom_call.1} parent=1 // pred_fallthru
      _
    // Predicated region
    $region34: #{tpu_custom_call.1} parent=1 // pred_check
      _
    $region35: #{tpu_custom_call.1} parent=1 // pred_check_branch
      %423 = sbr.rel (0) target = $region37
    $region36: #{tpu_custom_call.1} parent=1 // pred_region
      %s425 = ssub.s32 64, 64
      %426 = vsyncadd [#allocation5], %s425
      %s428 = sshll.u32 [#allocation4], 4
      %s429 = int_to_ptr.vmem [resolvable:$true] %s428
      %431 = dma.vmem_to_hbm [thread:$0]  %s429, 64, %s8, [#allocation5]
    $region37: #{tpu_custom_call.1} parent=1 // pred_fallthru
      _
    // Predicated region
    $region38: #{tpu_custom_call.1} parent=1 // pred_check
      _
    $region39: #{tpu_custom_call.1} parent=1 // pred_check_branch
      %433 = sbr.rel (0) target = $region41
    $region40: #{tpu_custom_call.1} parent=1 // pred_region
      %s435 = ssub.s32 128, 128
      %436 = vsyncadd [#allocation5], %s435
      %s438 = sshll.u32 [#allocation6], 4
      %s439 = int_to_ptr.vmem [resolvable:$true] %s438
      %441 = dma.vmem_to_hbm [thread:$0]  %s439, 128, %s9, [#allocation5]
    $region41: #{tpu_custom_call.1} parent=1 // pred_fallthru
      _
    // Predicated region
    $region42: #{tpu_custom_call.1} parent=1 // pred_check
      _
    $region43: #{tpu_custom_call.1} parent=1 // pred_check_branch
      %443 = sbr.rel (0) target = $region45
    $region44: #{tpu_custom_call.1} parent=1 // pred_region
      %444 = dma.done [#allocation3], 128
    $region45: #{tpu_custom_call.1} parent=1 // pred_fallthru
      _
    // Predicated region
    $region46: #{tpu_custom_call.1} parent=1 // pred_check
      _
    $region47: #{tpu_custom_call.1} parent=1 // pred_check_branch
      %446 = sbr.rel (0) target = $region49
    $region48: #{tpu_custom_call.1} parent=1 // pred_region
      %447 = dma.done [#allocation5], 64
    $region49: #{tpu_custom_call.1} parent=1 // pred_fallthru
      _
    // Predicated region
    $region50: #{tpu_custom_call.1} parent=1 // pred_check
      _
    $region51: #{tpu_custom_call.1} parent=1 // pred_check_branch
      %449 = sbr.rel (0) target = $region53
    $region52: #{tpu_custom_call.1} parent=1 // pred_region
      %450 = dma.done [#allocation5], 128
    $region53: #{tpu_custom_call.1} parent=1 // pred_fallthru
      _
    %451 = vsyncpa [#allocation3], 1
    %452 = vsyncpa [#allocation5], 1

</llo_original>
